<compile_context>
chip_gen: v7x
topology: tpu7x:2x2x1
jax: 0.10.0
libtpu: 0.0.40
codegen_flags: <defaults>
</compile_context>

<pallas_src>
import jax
import jax.numpy as jnp
from jax.experimental import pallas as pl
from jax.experimental.pallas import tpu as pltpu

# ---------------- configuration (small, consistent with the module) --------
B = 2                 # batch (sublane dim stays 2/8-utilized; accepted, DMA-bound)
N_MODALITIES = 2
IMG_HW = 16           # spatial size of each single-channel image
CLINICAL_DIM = 32     # clinical feature dim (module default 100, scaled down)
C_STEM = 8            # conv-stem channels of the simplified backbone
LAST_CHANNEL = 64     # stand-in for MobileNetV2 last_channel (1280), scaled down
FUSION_DIM = 512      # fusion_fc output / attention embed_dim (as in module)
NUM_HEADS = 4         # as in module (irrelevant numerically for seq_len==1)
OUT_HIDDEN = 128      # out_fc hidden (as in module)
NUM_CLASSES = 4       # out_fc output (as in module)
KSZ, STRIDE, PAD = 3, 2, 1
OUT_HW = (IMG_HW + 2 * PAD - KSZ) // STRIDE + 1      # 8
P = OUT_HW * OUT_HW                                  # 64 patches per image
K = KSZ * KSZ * 1                                    # 9 (single input channel)
LN_EPS = 1e-5

_VMEM = pl.BlockSpec(memory_space=pltpu.MemorySpace.VMEM)


def _bf16_dot(x, w):
    """bf16 x bf16 matmul with f32 accumulation (native MXU path)."""
    return jnp.dot(x.astype(jnp.bfloat16), w, preferred_element_type=jnp.float32)


# ---------------------------- fused Pallas kernel ----------------------------
def mobhynet_kernel(
    patches0_ref, patches1_ref, pool_ref, clin_ref,
    ws0_ref, bs0_ref, wf0b_ref, bf0b_ref,
    ws1_ref, bs1_ref, wf1b_ref, bf1b_ref,
    wc_ref, bc_ref, wfus0_ref, wfus1_ref, wfusc_ref, bfus_ref,
    wattn_ref, battn_ref,
    w1_ref, b1_ref, w2_ref, b2_ref,
    out_ref):
    """Backbones + clinical FC + fusion FC + (folded) attention + LN + MLP."""

    pool = pool_ref[...]                                   # [B, B*P] f32

    def backbone(patches, w_stem, b_stem, w_feat, b_feat):
        # conv stem as a single [B*P, K] x [K, C_STEM] matmul
        h = _bf16_dot(patches, w_stem) + b_stem            # [B*P, C_STEM]
        h = jnp.clip(h, 0.0, 6.0)                          # ReLU6 (MobileNetV2)
        # global average pool as an MXU contraction (block-diag 1/P matrix)
        g = jnp.dot(pool, h, preferred_element_type=jnp.float32)   # [B, C_STEM]
        return _bf16_dot(g, w_feat) + b_feat               # [B, LAST_CHANNEL]

    f0 = backbone(patches0_ref[...], ws0_ref[...], bs0_ref[...],
                  wf0b_ref[...], bf0b_ref[...])
    f1 = backbone(patches1_ref[...], ws1_ref[...], bs1_ref[...],
                  wf1b_ref[...], bf1b_ref[...])

    # clinical_fc: Linear + ReLU
    x_clin = jnp.maximum(_bf16_dot(clin_ref[...], wc_ref[...]) + bc_ref[...], 0.0)

    # fusion_fc on concat([f0, f1, x_clin]) as a sum of partial matmuls over the
    # split weight (avoids an in-kernel concat), then ReLU.
    x_fus = (_bf16_dot(f0, wfus0_ref[...])
             + _bf16_dot(f1, wfus1_ref[...])
             + _bf16_dot(x_clin, wfusc_ref[...])
             + bfus_ref[...])
    x_fus = jnp.maximum(x_fus, 0.0)                        # [B, 512]

    # MultiheadAttention(x, x, x) with sequence length 1: softmax over the single
    # key is exactly 1, so attn(x) = out_proj(V); Wv@Wo and bv@Wo+bo were folded
    # offline into wattn / battn -> one 512x512 matmul.
    attn = _bf16_dot(x_fus, wattn_ref[...]) + battn_ref[...]

    # LayerNorm(512) with its affine folded into w1/b1 offline.
    mu = jnp.mean(attn, axis=-1, keepdims=True)
    var = jnp.mean((attn - mu) ** 2, axis=-1, keepdims=True)
    xn = (attn - mu) * jax.lax.rsqrt(var + LN_EPS)

    # out_fc: Linear(512,128) -> ReLU -> Linear(128,4)
    h = jnp.maximum(_bf16_dot(xn, w1_ref[...]) + b1_ref[...], 0.0)
    out_ref[...] = _bf16_dot(h, w2_ref[...]) + b2_ref[...]


# ------------------------------ glue / wrapper -------------------------------
def im2col(x_nhwc, k=KSZ, stride=STRIDE, pad=PAD):
    """[B, H, W, C] -> [B*P, k*k*C] patches for a strided 3x3 conv."""
    bsz, h, w, c = x_nhwc.shape
    xp = jnp.pad(x_nhwc, ((0, 0), (pad, pad), (pad, pad), (0, 0)))
    oh = (h + 2 * pad - k) // stride + 1
    ow = (w + 2 * pad - k) // stride + 1
    cols = []
    for di in range(k):
        for dj in range(k):
            cols.append(xp[:, di:di + stride * oh:stride,
                           dj:dj + stride * ow:stride, :])
    patches = jnp.stack(cols, axis=-2)                     # [B, oh, ow, k*k, C]
    return patches.reshape(bsz * oh * ow, k * k * c)       # [B*P, K]


@jax.jit
def mobhynet_forward(images, clinical, params):
    patches = [im2col(jnp.transpose(img, (0, 2, 3, 1))) for img in images]
    # block-diagonal [B, B*P] pooling matrix: pool[b, b*P + p] = 1/P
    pool = (jnp.kron(jnp.eye(B, dtype=jnp.float32),
                     jnp.ones((1, P), jnp.float32)) / P)
    p = params
    args = (patches[0], patches[1], pool, clinical,
            p["ws0"], p["bs0"], p["wf0b"], p["bf0b"],
            p["ws1"], p["bs1"], p["wf1b"], p["bf1b"],
            p["wc"], p["bc"], p["wfus0"], p["wfus1"], p["wfusc"], p["bfus"],
            p["wattn"], p["battn"],
            p["w1"], p["b1"], p["w2"], p["b2"])
    return pl.pallas_call(
        mobhynet_kernel,
        out_shape=jax.ShapeDtypeStruct((B, NUM_CLASSES), jnp.float32),
        in_specs=[_VMEM] * len(args),
        out_specs=_VMEM,
    )(*args)


# ------------------------------ parameter init -------------------------------
def make_params(key):
    def dense(k, shape, scale=0.05):
        return (scale * jax.random.normal(k, shape)).astype(jnp.float32)

    def bf16(x):
        return x.astype(jnp.bfloat16)

    keys = jax.random.split(key, 32)
    it = iter(range(32))
    nk = lambda: keys[next(it)]

    params = {}
    # simplified per-modality backbones (weights in bf16, biases in f32)
    for m in range(N_MODALITIES):
        params[f"ws{m}"] = bf16(dense(nk(), (K, C_STEM)))
        params[f"bs{m}"] = dense(nk(), (1, C_STEM))
        params[f"wf{m}b"] = bf16(dense(nk(), (C_STEM, LAST_CHANNEL)))
        params[f"bf{m}b"] = dense(nk(), (1, LAST_CHANNEL))

    # clinical_fc + fusion_fc (fusion weight pre-split along the concat axis)
    params["wc"] = bf16(dense(nk(), (CLINICAL_DIM, 128)))
    params["bc"] = dense(nk(), (1, 128))
    params["wfus0"] = bf16(dense(nk(), (LAST_CHANNEL, FUSION_DIM)))
    params["wfus1"] = bf16(dense(nk(), (LAST_CHANNEL, FUSION_DIM)))
    params["wfusc"] = bf16(dense(nk(), (128, FUSION_DIM)))
    params["bfus"] = dense(nk(), (1, FUSION_DIM))

    # raw attention V / out projections, folded offline (seq_len == 1):
    #   attn(x) = (x @ Wv + bv) @ Wo + bo = x @ (Wv @ Wo) + (bv @ Wo + bo)
    wv = dense(nk(), (FUSION_DIM, FUSION_DIM))
    bv = dense(nk(), (1, FUSION_DIM))
    wo = dense(nk(), (FUSION_DIM, FUSION_DIM))
    bo = dense(nk(), (1, FUSION_DIM))
    params["wattn"] = bf16(wv @ wo)
    params["battn"] = bv @ wo + bo

    # LayerNorm affine folded into the following Linear:
    #   (g*xhat + b) @ W1 + b1 = xhat @ (diag(g) @ W1) + (b @ W1 + b1)
    ln_g = jnp.ones((1, FUSION_DIM), jnp.float32)          # torch LayerNorm init
    ln_b = jnp.zeros((1, FUSION_DIM), jnp.float32)
    w1 = dense(nk(), (FUSION_DIM, OUT_HIDDEN))
    b1 = dense(nk(), (1, OUT_HIDDEN))
    params["w1"] = bf16(ln_g.reshape(-1, 1) * w1)
    params["b1"] = ln_b @ w1 + b1
    params["w2"] = bf16(dense(nk(), (OUT_HIDDEN, NUM_CLASSES)))
    params["b2"] = dense(nk(), (1, NUM_CLASSES))
    return params


# ----------------------------------- main -------------------------------------
if __name__ == "__main__":
    root = jax.random.PRNGKey(0)
    k_img0, k_img1, k_clin, k_par = jax.random.split(root, 4)

    images = [
        jax.random.normal(k_img0, (B, 1, IMG_HW, IMG_HW), jnp.float32),
        jax.random.normal(k_img1, (B, 1, IMG_HW, IMG_HW), jnp.float32),
    ]
    clinical = jax.random.normal(k_clin, (B, CLINICAL_DIM), jnp.float32)
    params = make_params(k_par)

    out = mobhynet_forward(images, clinical, params)
    out = jax.block_until_ready(out)
    assert out.shape == (B, NUM_CLASSES) and bool(jnp.all(jnp.isfinite(out)))
    print("KERNEL_OK")
</pallas_src>

<mosaic_0001>
module attributes {stable_mosaic.version = 11 : i64} {
  func.func @mobhynet_kernel(%arg0: memref<128x9xf32, #tpu.memory_space<vmem>>, %arg1: memref<128x9xf32, #tpu.memory_space<vmem>>, %arg2: memref<2x128xf32, #tpu.memory_space<vmem>>, %arg3: memref<2x32xf32, #tpu.memory_space<vmem>>, %arg4: memref<9x8xbf16, #tpu.memory_space<vmem>>, %arg5: memref<1x8xf32, #tpu.memory_space<vmem>>, %arg6: memref<8x64xbf16, #tpu.memory_space<vmem>>, %arg7: memref<1x64xf32, #tpu.memory_space<vmem>>, %arg8: memref<9x8xbf16, #tpu.memory_space<vmem>>, %arg9: memref<1x8xf32, #tpu.memory_space<vmem>>, %arg10: memref<8x64xbf16, #tpu.memory_space<vmem>>, %arg11: memref<1x64xf32, #tpu.memory_space<vmem>>, %arg12: memref<32x128xbf16, #tpu.memory_space<vmem>>, %arg13: memref<1x128xf32, #tpu.memory_space<vmem>>, %arg14: memref<64x512xbf16, #tpu.memory_space<vmem>>, %arg15: memref<64x512xbf16, #tpu.memory_space<vmem>>, %arg16: memref<128x512xbf16, #tpu.memory_space<vmem>>, %arg17: memref<1x512xf32, #tpu.memory_space<vmem>>, %arg18: memref<512x512xbf16, #tpu.memory_space<vmem>>, %arg19: memref<1x512xf32, #tpu.memory_space<vmem>>, %arg20: memref<512x128xbf16, #tpu.memory_space<vmem>>, %arg21: memref<1x128xf32, #tpu.memory_space<vmem>>, %arg22: memref<128x4xbf16, #tpu.memory_space<vmem>>, %arg23: memref<1x4xf32, #tpu.memory_space<vmem>>, %arg24: memref<2x4xf32, #tpu.memory_space<vmem>>) attributes {dimension_semantics = [], scalar_prefetch = 0 : i64, scratch_operands = 0 : i64, tpu.core_type = #tpu.core_type<tc>} {
    %c0 = arith.constant 0 : index
    %c0_0 = arith.constant 0 : index
    %0 = vector.load %arg2[%c0, %c0_0] : memref<2x128xf32, #tpu.memory_space<vmem>>, vector<2x128xf32>
    %c0_1 = arith.constant 0 : index
    %c0_2 = arith.constant 0 : index
    %1 = vector.load %arg0[%c0_1, %c0_2] : memref<128x9xf32, #tpu.memory_space<vmem>>, vector<128x9xf32>
    %c0_3 = arith.constant 0 : index
    %c0_4 = arith.constant 0 : index
    %2 = vector.load %arg4[%c0_3, %c0_4] : memref<9x8xbf16, #tpu.memory_space<vmem>>, vector<9x8xbf16>
    %c0_5 = arith.constant 0 : index
    %c0_6 = arith.constant 0 : index
    %3 = vector.load %arg5[%c0_5, %c0_6] : memref<1x8xf32, #tpu.memory_space<vmem>>, vector<1x8xf32>
    %c0_7 = arith.constant 0 : index
    %c0_8 = arith.constant 0 : index
    %4 = vector.load %arg6[%c0_7, %c0_8] : memref<8x64xbf16, #tpu.memory_space<vmem>>, vector<8x64xbf16>
    %c0_9 = arith.constant 0 : index
    %c0_10 = arith.constant 0 : index
    %5 = vector.load %arg7[%c0_9, %c0_10] : memref<1x64xf32, #tpu.memory_space<vmem>>, vector<1x64xf32>
    %6 = arith.truncf %1 : vector<128x9xf32> to vector<128x9xbf16>
    %cst = arith.constant dense<0.000000e+00> : vector<128x8xf32>
    %7 = tpu.matmul %6, %2, %cst {dimension_numbers = #tpu.dot_dimension_numbers<[1], [0], [0], [1], [0, 0, 1, 1], [], []>} : vector<128x9xbf16>, vector<9x8xbf16>, vector<128x8xf32> -> vector<128x8xf32>
    %8 = vector.broadcast %3 : vector<1x8xf32> to vector<128x8xf32>
    %9 = arith.addf %7, %8 : vector<128x8xf32>
    %cst_11 = arith.constant 0.000000e+00 : f32
    %cst_12 = arith.constant 6.000000e+00 : f32
    %10 = vector.broadcast %cst_11 : f32 to vector<128x8xf32>
    %11 = arith.maximumf %10, %9 : vector<128x8xf32>
    %12 = vector.broadcast %cst_12 : f32 to vector<128x8xf32>
    %13 = arith.minimumf %12, %11 : vector<128x8xf32>
    %cst_13 = arith.constant dense<0.000000e+00> : vector<2x8xf32>
    %14 = tpu.matmul %0, %13, %cst_13 {dimension_numbers = #tpu.dot_dimension_numbers<[1], [0], [0], [1], [0, 0, 1, 1], [], []>} : vector<2x128xf32>, vector<128x8xf32>, vector<2x8xf32> -> vector<2x8xf32>
    %15 = arith.truncf %14 : vector<2x8xf32> to vector<2x8xbf16>
    %cst_14 = arith.constant dense<0.000000e+00> : vector<2x64xf32>
    %16 = tpu.matmul %15, %4, %cst_14 {dimension_numbers = #tpu.dot_dimension_numbers<[1], [0], [0], [1], [0, 0, 1, 1], [], []>} : vector<2x8xbf16>, vector<8x64xbf16>, vector<2x64xf32> -> vector<2x64xf32>
    %17 = vector.broadcast %5 : vector<1x64xf32> to vector<2x64xf32>
    %18 = arith.addf %16, %17 : vector<2x64xf32>
    %c0_15 = arith.constant 0 : index
    %c0_16 = arith.constant 0 : index
    %19 = vector.load %arg1[%c0_15, %c0_16] : memref<128x9xf32, #tpu.memory_space<vmem>>, vector<128x9xf32>
    %c0_17 = arith.constant 0 : index
    %c0_18 = arith.constant 0 : index
    %20 = vector.load %arg8[%c0_17, %c0_18] : memref<9x8xbf16, #tpu.memory_space<vmem>>, vector<9x8xbf16>
    %c0_19 = arith.constant 0 : index
    %c0_20 = arith.constant 0 : index
    %21 = vector.load %arg9[%c0_19, %c0_20] : memref<1x8xf32, #tpu.memory_space<vmem>>, vector<1x8xf32>
    %c0_21 = arith.constant 0 : index
    %c0_22 = arith.constant 0 : index
    %22 = vector.load %arg10[%c0_21, %c0_22] : memref<8x64xbf16, #tpu.memory_space<vmem>>, vector<8x64xbf16>
    %c0_23 = arith.constant 0 : index
    %c0_24 = arith.constant 0 : index
    %23 = vector.load %arg11[%c0_23, %c0_24] : memref<1x64xf32, #tpu.memory_space<vmem>>, vector<1x64xf32>
    %24 = arith.truncf %19 : vector<128x9xf32> to vector<128x9xbf16>
    %cst_25 = arith.constant dense<0.000000e+00> : vector<128x8xf32>
    %25 = tpu.matmul %24, %20, %cst_25 {dimension_numbers = #tpu.dot_dimension_numbers<[1], [0], [0], [1], [0, 0, 1, 1], [], []>} : vector<128x9xbf16>, vector<9x8xbf16>, vector<128x8xf32> -> vector<128x8xf32>
    %26 = vector.broadcast %21 : vector<1x8xf32> to vector<128x8xf32>
    %27 = arith.addf %25, %26 : vector<128x8xf32>
    %cst_26 = arith.constant 0.000000e+00 : f32
    %cst_27 = arith.constant 6.000000e+00 : f32
    %28 = vector.broadcast %cst_26 : f32 to vector<128x8xf32>
    %29 = arith.maximumf %28, %27 : vector<128x8xf32>
    %30 = vector.broadcast %cst_27 : f32 to vector<128x8xf32>
    %31 = arith.minimumf %30, %29 : vector<128x8xf32>
    %cst_28 = arith.constant dense<0.000000e+00> : vector<2x8xf32>
    %32 = tpu.matmul %0, %31, %cst_28 {dimension_numbers = #tpu.dot_dimension_numbers<[1], [0], [0], [1], [0, 0, 1, 1], [], []>} : vector<2x128xf32>, vector<128x8xf32>, vector<2x8xf32> -> vector<2x8xf32>
    %33 = arith.truncf %32 : vector<2x8xf32> to vector<2x8xbf16>
    %cst_29 = arith.constant dense<0.000000e+00> : vector<2x64xf32>
    %34 = tpu.matmul %33, %22, %cst_29 {dimension_numbers = #tpu.dot_dimension_numbers<[1], [0], [0], [1], [0, 0, 1, 1], [], []>} : vector<2x8xbf16>, vector<8x64xbf16>, vector<2x64xf32> -> vector<2x64xf32>
    %35 = vector.broadcast %23 : vector<1x64xf32> to vector<2x64xf32>
    %36 = arith.addf %34, %35 : vector<2x64xf32>
    %c0_30 = arith.constant 0 : index
    %c0_31 = arith.constant 0 : index
    %37 = vector.load %arg3[%c0_30, %c0_31] : memref<2x32xf32, #tpu.memory_space<vmem>>, vector<2x32xf32>
    %c0_32 = arith.constant 0 : index
    %c0_33 = arith.constant 0 : index
    %38 = vector.load %arg12[%c0_32, %c0_33] : memref<32x128xbf16, #tpu.memory_space<vmem>>, vector<32x128xbf16>
    %39 = arith.truncf %37 : vector<2x32xf32> to vector<2x32xbf16>
    %cst_34 = arith.constant dense<0.000000e+00> : vector<2x128xf32>
    %40 = tpu.matmul %39, %38, %cst_34 {dimension_numbers = #tpu.dot_dimension_numbers<[1], [0], [0], [1], [0, 0, 1, 1], [], []>} : vector<2x32xbf16>, vector<32x128xbf16>, vector<2x128xf32> -> vector<2x128xf32>
    %c0_35 = arith.constant 0 : index
    %c0_36 = arith.constant 0 : index
    %41 = vector.load %arg13[%c0_35, %c0_36] : memref<1x128xf32, #tpu.memory_space<vmem>>, vector<1x128xf32>
    %42 = vector.broadcast %41 : vector<1x128xf32> to vector<2x128xf32>
    %43 = arith.addf %40, %42 : vector<2x128xf32>
    %cst_37 = arith.constant 0.000000e+00 : f32
    %44 = vector.broadcast %cst_37 : f32 to vector<2x128xf32>
    %45 = arith.maximumf %43, %44 : vector<2x128xf32>
    %c0_38 = arith.constant 0 : index
    %c0_39 = arith.constant 0 : index
    %46 = vector.load %arg14[%c0_38, %c0_39] : memref<64x512xbf16, #tpu.memory_space<vmem>>, vector<64x512xbf16>
    %47 = arith.truncf %18 : vector<2x64xf32> to vector<2x64xbf16>
    %cst_40 = arith.constant dense<0.000000e+00> : vector<2x512xf32>
    %48 = tpu.matmul %47, %46, %cst_40 {dimension_numbers = #tpu.dot_dimension_numbers<[1], [0], [0], [1], [0, 0, 1, 1], [], []>} : vector<2x64xbf16>, vector<64x512xbf16>, vector<2x512xf32> -> vector<2x512xf32>
    %c0_41 = arith.constant 0 : index
    %c0_42 = arith.constant 0 : index
    %49 = vector.load %arg15[%c0_41, %c0_42] : memref<64x512xbf16, #tpu.memory_space<vmem>>, vector<64x512xbf16>
    %50 = arith.truncf %36 : vector<2x64xf32> to vector<2x64xbf16>
    %cst_43 = arith.constant dense<0.000000e+00> : vector<2x512xf32>
    %51 = tpu.matmul %50, %49, %cst_43 {dimension_numbers = #tpu.dot_dimension_numbers<[1], [0], [0], [1], [0, 0, 1, 1], [], []>} : vector<2x64xbf16>, vector<64x512xbf16>, vector<2x512xf32> -> vector<2x512xf32>
    %52 = arith.addf %48, %51 : vector<2x512xf32>
    %c0_44 = arith.constant 0 : index
    %c0_45 = arith.constant 0 : index
    %53 = vector.load %arg16[%c0_44, %c0_45] : memref<128x512xbf16, #tpu.memory_space<vmem>>, vector<128x512xbf16>
    %54 = arith.truncf %45 : vector<2x128xf32> to vector<2x128xbf16>
    %cst_46 = arith.constant dense<0.000000e+00> : vector<2x512xf32>
    %55 = tpu.matmul %54, %53, %cst_46 {dimension_numbers = #tpu.dot_dimension_numbers<[1], [0], [0], [1], [0, 0, 1, 1], [], []>} : vector<2x128xbf16>, vector<128x512xbf16>, vector<2x512xf32> -> vector<2x512xf32>
    %56 = arith.addf %52, %55 : vector<2x512xf32>
    %c0_47 = arith.constant 0 : index
    %c0_48 = arith.constant 0 : index
    %57 = vector.load %arg17[%c0_47, %c0_48] : memref<1x512xf32, #tpu.memory_space<vmem>>, vector<1x512xf32>
    %58 = vector.broadcast %57 : vector<1x512xf32> to vector<2x512xf32>
    %59 = arith.addf %56, %58 : vector<2x512xf32>
    %cst_49 = arith.constant 0.000000e+00 : f32
    %60 = vector.broadcast %cst_49 : f32 to vector<2x512xf32>
    %61 = arith.maximumf %59, %60 : vector<2x512xf32>
    %c0_50 = arith.constant 0 : index
    %c0_51 = arith.constant 0 : index
    %62 = vector.load %arg18[%c0_50, %c0_51] : memref<512x512xbf16, #tpu.memory_space<vmem>>, vector<512x512xbf16>
    %63 = arith.truncf %61 : vector<2x512xf32> to vector<2x512xbf16>
    %cst_52 = arith.constant dense<0.000000e+00> : vector<2x512xf32>
    %64 = tpu.matmul %63, %62, %cst_52 {dimension_numbers = #tpu.dot_dimension_numbers<[1], [0], [0], [1], [0, 0, 1, 1], [], []>} : vector<2x512xbf16>, vector<512x512xbf16>, vector<2x512xf32> -> vector<2x512xf32>
    %c0_53 = arith.constant 0 : index
    %c0_54 = arith.constant 0 : index
    %65 = vector.load %arg19[%c0_53, %c0_54] : memref<1x512xf32, #tpu.memory_space<vmem>>, vector<1x512xf32>
    %66 = vector.broadcast %65 : vector<1x512xf32> to vector<2x512xf32>
    %67 = arith.addf %64, %66 : vector<2x512xf32>
    %cst_55 = arith.constant dense<0.000000e+00> : vector<2xf32>
    %68 = vector.multi_reduction <add>, %67, %cst_55 [1] : vector<2x512xf32> to vector<2xf32>
    %69 = vector.shape_cast %68 : vector<2xf32> to vector<2x1xf32>
    %cst_56 = arith.constant 5.120000e+02 : f32
    %70 = vector.broadcast %cst_56 : f32 to vector<2x1xf32>
    %71 = arith.divf %69, %70 : vector<2x1xf32>
    %72 = vector.broadcast %71 : vector<2x1xf32> to vector<2x512xf32>
    %73 = arith.subf %67, %72 : vector<2x512xf32>
    %74 = arith.mulf %73, %73 : vector<2x512xf32>
    %cst_57 = arith.constant dense<0.000000e+00> : vector<2xf32>
    %75 = vector.multi_reduction <add>, %74, %cst_57 [1] : vector<2x512xf32> to vector<2xf32>
    %76 = vector.shape_cast %75 : vector<2xf32> to vector<2x1xf32>
    %cst_58 = arith.constant 5.120000e+02 : f32
    %77 = vector.broadcast %cst_58 : f32 to vector<2x1xf32>
    %78 = arith.divf %76, %77 : vector<2x1xf32>
    %79 = vector.broadcast %71 : vector<2x1xf32> to vector<2x512xf32>
    %80 = arith.subf %67, %79 : vector<2x512xf32>
    %cst_59 = arith.constant 9.99999974E-6 : f32
    %81 = vector.broadcast %cst_59 : f32 to vector<2x1xf32>
    %82 = arith.addf %78, %81 : vector<2x1xf32>
    %83 = math.rsqrt %82 : vector<2x1xf32>
    %84 = vector.broadcast %83 : vector<2x1xf32> to vector<2x512xf32>
    %85 = arith.mulf %80, %84 : vector<2x512xf32>
    %c0_60 = arith.constant 0 : index
    %c0_61 = arith.constant 0 : index
    %86 = vector.load %arg20[%c0_60, %c0_61] : memref<512x128xbf16, #tpu.memory_space<vmem>>, vector<512x128xbf16>
    %87 = arith.truncf %85 : vector<2x512xf32> to vector<2x512xbf16>
    %cst_62 = arith.constant dense<0.000000e+00> : vector<2x128xf32>
    %88 = tpu.matmul %87, %86, %cst_62 {dimension_numbers = #tpu.dot_dimension_numbers<[1], [0], [0], [1], [0, 0, 1, 1], [], []>} : vector<2x512xbf16>, vector<512x128xbf16>, vector<2x128xf32> -> vector<2x128xf32>
    %c0_63 = arith.constant 0 : index
    %c0_64 = arith.constant 0 : index
    %89 = vector.load %arg21[%c0_63, %c0_64] : memref<1x128xf32, #tpu.memory_space<vmem>>, vector<1x128xf32>
    %90 = vector.broadcast %89 : vector<1x128xf32> to vector<2x128xf32>
    %91 = arith.addf %88, %90 : vector<2x128xf32>
    %cst_65 = arith.constant 0.000000e+00 : f32
    %92 = vector.broadcast %cst_65 : f32 to vector<2x128xf32>
    %93 = arith.maximumf %91, %92 : vector<2x128xf32>
    %c0_66 = arith.constant 0 : index
    %c0_67 = arith.constant 0 : index
    %94 = vector.load %arg22[%c0_66, %c0_67] : memref<128x4xbf16, #tpu.memory_space<vmem>>, vector<128x4xbf16>
    %95 = arith.truncf %93 : vector<2x128xf32> to vector<2x128xbf16>
    %cst_68 = arith.constant dense<0.000000e+00> : vector<2x4xf32>
    %96 = tpu.matmul %95, %94, %cst_68 {dimension_numbers = #tpu.dot_dimension_numbers<[1], [0], [0], [1], [0, 0, 1, 1], [], []>} : vector<2x128xbf16>, vector<128x4xbf16>, vector<2x4xf32> -> vector<2x4xf32>
    %c0_69 = arith.constant 0 : index
    %c0_70 = arith.constant 0 : index
    %97 = vector.load %arg23[%c0_69, %c0_70] : memref<1x4xf32, #tpu.memory_space<vmem>>, vector<1x4xf32>
    %98 = vector.broadcast %97 : vector<1x4xf32> to vector<2x4xf32>
    %99 = arith.addf %96, %98 : vector<2x4xf32>
    %c0_71 = arith.constant 0 : index
    %c0_72 = arith.constant 0 : index
    %100 = vector.load %arg24[%c0_71, %c0_72] : memref<2x4xf32, #tpu.memory_space<vmem>>, vector<2x4xf32>
    tpu.vector_store %arg24[%c0_71, %c0_72], %99 {strides = array<i32>} : memref<2x4xf32, #tpu.memory_space<vmem>>, vector<2x4xf32>,
    return
  }
}

</mosaic_0001>

<llo_original>
// kernel: mobhynet_forward.1
$region0: #{mobhynet_forward.1}
  #allocation0 [shape = 'u32[]', space=smem, size = 0x4, offset = 0x4, fixed_abs, tag = 'smem constant byte address 0x4 - core index']
  #allocation1 [shape = 'u32[144,128]{1,0:T(1,128)}', space=vmem, size = 0x12000, scoped, tag = 'internal scratch']
  %s0 = inlined_call_operand.vmem [shape: f32[128,9], index: 0, kind: input, shape index: {}]
  %s1 = inlined_call_operand.vmem [shape: f32[128,9], index: 1, kind: input, shape index: {}]
  %s2 = inlined_call_operand.vmem [shape: f32[2,128], index: 2, kind: input, shape index: {}]
  %s3 = inlined_call_operand.vmem [shape: f32[2,32], index: 3, kind: input, shape index: {}]
  %s4 = inlined_call_operand.vmem [shape: bf16[9,8], index: 4, kind: input, shape index: {}]
  %s5 = inlined_call_operand.vmem [shape: f32[1,8], index: 5, kind: input, shape index: {}]
  %s6 = inlined_call_operand.vmem [shape: bf16[8,64], index: 6, kind: input, shape index: {}]
  %s7 = inlined_call_operand.vmem [shape: f32[1,64], index: 7, kind: input, shape index: {}]
  %s8 = inlined_call_operand.vmem [shape: bf16[9,8], index: 8, kind: input, shape index: {}]
  %s9 = inlined_call_operand.vmem [shape: f32[1,8], index: 9, kind: input, shape index: {}]
  %s10 = inlined_call_operand.vmem [shape: bf16[8,64], index: 10, kind: input, shape index: {}]
  %s11 = inlined_call_operand.vmem [shape: f32[1,64], index: 11, kind: input, shape index: {}]
  %s12 = inlined_call_operand.vmem [shape: bf16[32,128], index: 12, kind: input, shape index: {}]
  %s13 = inlined_call_operand.vmem [shape: f32[1,128], index: 13, kind: input, shape index: {}]
  %s14 = inlined_call_operand.vmem [shape: bf16[64,512], index: 14, kind: input, shape index: {}]
  %s15 = inlined_call_operand.hbm [shape: bf16[64,512], index: 15, kind: input, shape index: {}]
  %s16 = inlined_call_operand.vmem [shape: bf16[128,512], index: 16, kind: input, shape index: {}]
  %s17 = inlined_call_operand.vmem [shape: f32[1,512], index: 17, kind: input, shape index: {}]
  %s18 = inlined_call_operand.vmem [shape: bf16[512,512], index: 18, kind: input, shape index: {}]
  %s19 = inlined_call_operand.vmem [shape: f32[1,512], index: 19, kind: input, shape index: {}]
  %s20 = inlined_call_operand.hbm [shape: bf16[512,128], index: 20, kind: input, shape index: {}]
  %s21 = inlined_call_operand.vmem [shape: f32[1,128], index: 21, kind: input, shape index: {}]
  %s22 = inlined_call_operand.vmem [shape: bf16[128,4], index: 22, kind: input, shape index: {}]
  %s23 = inlined_call_operand.vmem [shape: f32[1,4], index: 23, kind: input, shape index: {}]
  %s24 = inlined_call_operand.hbm [shape: f32[2,4], index: 24, kind: output, shape index: {}]
  %s25 = sld [smem:[#allocation0]]
  $region114: #{mobhynet_forward.1} parent=0
    _
  %s27 = ssub.s32 1, %s25
  %s28 = scalar_select 0, %s27, %s25
  $region1: #{mobhynet_forward.1} parent=0
    #allocation2 [shape = 'u8[65536]{0}', space=vmem, size = 0x10000, scoped, tag = 'input window, operand 15, single buffered']
    #allocation3 [shape = 's32[1]{0}', space=sflag, size = 0x4, scoped, tag = 'scoped memory for mobhynet_forward.1']
    #allocation4 [shape = 's32[1]{0}', space=sflag, size = 0x4, scoped, tag = 'scoped memory for mobhynet_forward.1']
    #allocation5 [shape = 'u8[131072]{0}', space=vmem, size = 0x20000, scoped, tag = 'input window, operand 20, single buffered']
    #allocation6 [shape = 's32[1]{0}', space=sflag, size = 0x4, scoped, tag = 'scoped memory for mobhynet_forward.1']
    #allocation7 [shape = 'u8[1024]{0}', space=vmem, size = 0x400, scoped, tag = 'output window, operand 0, single buffered']
    %29 = vsyncpa [#allocation3], 0
    %30 = vsyncpa [#allocation6], 0
    %31 = vsyncpa [#allocation4], 0
    // Predicated region
    $region2: #{mobhynet_forward.1} parent=1 // pred_check
      _
    $region3: #{mobhynet_forward.1} parent=1 // pred_check_branch
      %33 = sbr.rel (0) target = $region5
    $region4: #{mobhynet_forward.1} parent=1 // pred_region
      _
    $region5: #{mobhynet_forward.1} parent=1 // pred_fallthru
      _
    // Predicated region
    $region6: #{mobhynet_forward.1} parent=1 // pred_check
      _
    $region7: #{mobhynet_forward.1} parent=1 // pred_check_branch
      %35 = sbr.rel (0) target = $region9
    $region8: #{mobhynet_forward.1} parent=1 // pred_region
      _
    $region9: #{mobhynet_forward.1} parent=1 // pred_fallthru
      _
    // Predicated region
    $region10: #{mobhynet_forward.1} parent=1 // pred_check
      _
    $region11: #{mobhynet_forward.1} parent=1 // pred_check_branch
      %37 = sbr.rel (0) target = $region13
    $region12: #{mobhynet_forward.1} parent=1 // pred_region
      _
    $region13: #{mobhynet_forward.1} parent=1 // pred_fallthru
      _
    // Predicated region
    $region14: #{mobhynet_forward.1} parent=1 // pred_check
      _
    $region15: #{mobhynet_forward.1} parent=1 // pred_check_branch
      %39 = sbr.rel (0) target = $region17
    $region16: #{mobhynet_forward.1} parent=1 // pred_region
      _
    $region17: #{mobhynet_forward.1} parent=1 // pred_fallthru
      _
    // Predicated region
    $region18: #{mobhynet_forward.1} parent=1 // pred_check
      _
    $region19: #{mobhynet_forward.1} parent=1 // pred_check_branch
      %41 = sbr.rel (0) target = $region21
    $region20: #{mobhynet_forward.1} parent=1 // pred_region
      _
    $region21: #{mobhynet_forward.1} parent=1 // pred_fallthru
      _
    // Predicated region
    $region22: #{mobhynet_forward.1} parent=1 // pred_check
      _
    $region23: #{mobhynet_forward.1} parent=1 // pred_check_branch
      %43 = sbr.rel (0) target = $region25
    $region24: #{mobhynet_forward.1} parent=1 // pred_region
      _
    $region25: #{mobhynet_forward.1} parent=1 // pred_fallthru
      _
    // Predicated region
    $region26: #{mobhynet_forward.1} parent=1 // pred_check
      _
    $region27: #{mobhynet_forward.1} parent=1 // pred_check_branch
      %45 = sbr.rel (0) target = $region29
    $region28: #{mobhynet_forward.1} parent=1 // pred_region
      _
    $region29: #{mobhynet_forward.1} parent=1 // pred_fallthru
      _
    // Predicated region
    $region30: #{mobhynet_forward.1} parent=1 // pred_check
      _
    $region31: #{mobhynet_forward.1} parent=1 // pred_check_branch
      %47 = sbr.rel (0) target = $region33
    $region32: #{mobhynet_forward.1} parent=1 // pred_region
      _
    $region33: #{mobhynet_forward.1} parent=1 // pred_fallthru
      _
    // Predicated region
    $region34: #{mobhynet_forward.1} parent=1 // pred_check
      _
    $region35: #{mobhynet_forward.1} parent=1 // pred_check_branch
      %49 = sbr.rel (0) target = $region37
    $region36: #{mobhynet_forward.1} parent=1 // pred_region
      _
    $region37: #{mobhynet_forward.1} parent=1 // pred_fallthru
      _
    // Predicated region
    $region38: #{mobhynet_forward.1} parent=1 // pred_check
      _
    $region39: #{mobhynet_forward.1} parent=1 // pred_check_branch
      %51 = sbr.rel (0) target = $region41
    $region40: #{mobhynet_forward.1} parent=1 // pred_region
      _
    $region41: #{mobhynet_forward.1} parent=1 // pred_fallthru
      _
    // Predicated region
    $region42: #{mobhynet_forward.1} parent=1 // pred_check
      _
    $region43: #{mobhynet_forward.1} parent=1 // pred_check_branch
      %53 = sbr.rel (0) target = $region45
    $region44: #{mobhynet_forward.1} parent=1 // pred_region
      _
    $region45: #{mobhynet_forward.1} parent=1 // pred_fallthru
      _
    // Predicated region
    $region46: #{mobhynet_forward.1} parent=1 // pred_check
      _
    $region47: #{mobhynet_forward.1} parent=1 // pred_check_branch
      %55 = sbr.rel (0) target = $region49
    $region48: #{mobhynet_forward.1} parent=1 // pred_region
      _
    $region49: #{mobhynet_forward.1} parent=1 // pred_fallthru
      _
    // Predicated region
    $region50: #{mobhynet_forward.1} parent=1 // pred_check
      _
    $region51: #{mobhynet_forward.1} parent=1 // pred_check_branch
      %57 = sbr.rel (0) target = $region53
    $region52: #{mobhynet_forward.1} parent=1 // pred_region
      _
    $region53: #{mobhynet_forward.1} parent=1 // pred_fallthru
      _
    // Predicated region
    $region54: #{mobhynet_forward.1} parent=1 // pred_check
      _
    $region55: #{mobhynet_forward.1} parent=1 // pred_check_branch
      %59 = sbr.rel (0) target = $region57
    $region56: #{mobhynet_forward.1} parent=1 // pred_region
      _
    $region57: #{mobhynet_forward.1} parent=1 // pred_fallthru
      _
    // Predicated region
    $region58: #{mobhynet_forward.1} parent=1 // pred_check
      _
    $region59: #{mobhynet_forward.1} parent=1 // pred_check_branch
      %61 = sbr.rel (0) target = $region61
    $region60: #{mobhynet_forward.1} parent=1 // pred_region
      _
    $region61: #{mobhynet_forward.1} parent=1 // pred_fallthru
      _
    // Predicated region
    $region62: #{mobhynet_forward.1} parent=1 // pred_check
      _
    $region63: #{mobhynet_forward.1} parent=1 // pred_check_branch
      %63 = sbr.rel (0) target = $region65
    $region64: #{mobhynet_forward.1} parent=1 // pred_region
      %s65 = ssub.s32 2048, 2048
      %66 = vsyncadd [#allocation3], %s65
      %s67 = sshll.u32 [#allocation2], 4
      %s68 = int_to_ptr.vmem [resolvable:$true] %s67
      %73 = dma.hbm_to_vmem [thread:$0]  %s15, 2048, %s68, [#allocation3], 256, 256, 16
    $region65: #{mobhynet_forward.1} parent=1 // pred_fallthru
      _
    // Predicated region
    $region66: #{mobhynet_forward.1} parent=1 // pred_check
      _
    $region67: #{mobhynet_forward.1} parent=1 // pred_check_branch
      %75 = sbr.rel (0) target = $region69
    $region68: #{mobhynet_forward.1} parent=1 // pred_region
      _
    $region69: #{mobhynet_forward.1} parent=1 // pred_fallthru
      _
    // Predicated region
    $region70: #{mobhynet_forward.1} parent=1 // pred_check
      _
    $region71: #{mobhynet_forward.1} parent=1 // pred_check_branch
      %77 = sbr.rel (0) target = $region73
    $region72: #{mobhynet_forward.1} parent=1 // pred_region
      _
    $region73: #{mobhynet_forward.1} parent=1 // pred_fallthru
      _
    // Predicated region
    $region74: #{mobhynet_forward.1} parent=1 // pred_check
      _
    $region75: #{mobhynet_forward.1} parent=1 // pred_check_branch
      %79 = sbr.rel (0) target = $region77
    $region76: #{mobhynet_forward.1} parent=1 // pred_region
      _
    $region77: #{mobhynet_forward.1} parent=1 // pred_fallthru
      _
    // Predicated region
    $region78: #{mobhynet_forward.1} parent=1 // pred_check
      _
    $region79: #{mobhynet_forward.1} parent=1 // pred_check_branch
      %81 = sbr.rel (0) target = $region81
    $region80: #{mobhynet_forward.1} parent=1 // pred_region
      _
    $region81: #{mobhynet_forward.1} parent=1 // pred_fallthru
      _
    // Predicated region
    $region82: #{mobhynet_forward.1} parent=1 // pred_check
      _
    $region83: #{mobhynet_forward.1} parent=1 // pred_check_branch
      %83 = sbr.rel (0) target = $region85
    $region84: #{mobhynet_forward.1} parent=1 // pred_region
      %s85 = ssub.s32 4096, 4096
      %86 = vsyncadd [#allocation6], %s85
      %s87 = sshll.u32 [#allocation5], 4
      %s88 = int_to_ptr.vmem [resolvable:$true] %s87
      %93 = dma.hbm_to_vmem [thread:$0]  %s20, 4096, %s88, [#allocation6], 64, 64, 4
    $region85: #{mobhynet_forward.1} parent=1 // pred_fallthru
      _
    // Predicated region
    $region86: #{mobhynet_forward.1} parent=1 // pred_check
      _
    $region87: #{mobhynet_forward.1} parent=1 // pred_check_branch
      %95 = sbr.rel (0) target = $region89
    $region88: #{mobhynet_forward.1} parent=1 // pred_region
      _
    $region89: #{mobhynet_forward.1} parent=1 // pred_fallthru
      _
    // Predicated region
    $region90: #{mobhynet_forward.1} parent=1 // pred_check
      _
    $region91: #{mobhynet_forward.1} parent=1 // pred_check_branch
      %97 = sbr.rel (0) target = $region93
    $region92: #{mobhynet_forward.1} parent=1 // pred_region
      _
    $region93: #{mobhynet_forward.1} parent=1 // pred_fallthru
      _
    // Predicated region
    $region94: #{mobhynet_forward.1} parent=1 // pred_check
      _
    $region95: #{mobhynet_forward.1} parent=1 // pred_check_branch
      %99 = sbr.rel (0) target = $region97
    $region96: #{mobhynet_forward.1} parent=1 // pred_region
      _
    $region97: #{mobhynet_forward.1} parent=1 // pred_fallthru
      _
    // Predicated region
    $region98: #{mobhynet_forward.1} parent=1 // pred_check
      _
    $region99: #{mobhynet_forward.1} parent=1 // pred_check_branch
      %101 = sbr.rel (0) target = $region101
    $region100: #{mobhynet_forward.1} parent=1 // pred_region
      %102 = dma.done [#allocation3], 2048
    $region101: #{mobhynet_forward.1} parent=1 // pred_fallthru
      _
    // Predicated region
    $region102: #{mobhynet_forward.1} parent=1 // pred_check
      _
    $region103: #{mobhynet_forward.1} parent=1 // pred_check_branch
      %104 = sbr.rel (0) target = $region105
    $region104: #{mobhynet_forward.1} parent=1 // pred_region
      %105 = dma.done [#allocation6], 4096
    $region105: #{mobhynet_forward.1} parent=1 // pred_fallthru
      _
    %v107 = vld [vmem:[%s2] sm:$0x3]
    %v108 = vld [vmem:[%s0] sm:$0xff]
    %v109 = vld [vmem:[%s0 + $0x8] sm:$0xff]
    %v110 = vld [vmem:[%s0 + $0x10] sm:$0xff]
    %v111 = vld [vmem:[%s0 + $0x18] sm:$0xff]
    %v112 = vld [vmem:[%s0 + $0x20] sm:$0xff]
    %v113 = vld [vmem:[%s0 + $0x28] sm:$0xff]
    %v114 = vld [vmem:[%s0 + $0x30] sm:$0xff]
    %v115 = vld [vmem:[%s0 + $0x38] sm:$0xff]
    %v116 = vld [vmem:[%s0 + $0x40] sm:$0xff]
    %v117 = vld [vmem:[%s0 + $0x48] sm:$0xff]
    %v118 = vld [vmem:[%s0 + $0x50] sm:$0xff]
    %v119 = vld [vmem:[%s0 + $0x58] sm:$0xff]
    %v120 = vld [vmem:[%s0 + $0x60] sm:$0xff]
    %v121 = vld [vmem:[%s0 + $0x68] sm:$0xff]
    %v122 = vld [vmem:[%s0 + $0x70] sm:$0xff]
    %v123 = vld [vmem:[%s0 + $0x78] sm:$0xff]
    %v124 = vld [vmem:[%s4] sm:$0xf]
    %v125 = vld [vmem:[%s4 + $0x4] sm:$0x1]
    %v126 = vld [vmem:[%s5] sm:$0x1]
    %v127 = vld [vmem:[%s6] sm:$0xf]
    %v128 = vld [vmem:[%s7] sm:$0x1]
    %v129 = vpack.c.bf16 %v109, %v108
    %v130 = vpack.c.bf16 %v111, %v110
    %v131 = vpack.c.bf16 %v113, %v112
    %v132 = vpack.c.bf16 %v115, %v114
    %v133 = vpack.c.bf16 %v117, %v116
    %v134 = vpack.c.bf16 %v119, %v118
    %v135 = vpack.c.bf16 %v121, %v120
    %v136 = vpack.c.bf16 %v123, %v122
    %v138 = vlaneseq
    %v139 = vshrl.u32 %v138, 7
    %v140 = vsub.s32 0, %v139
    %v141 = vrot.slane %v126, %v140
    %v145 = vunpack.c.l.b16 %v124
    %v146 = vunpack.c.l.b16 %v125
    %v147 = vpack.c.b16 %v146, %v145
    %vm148 = vcmask 72704
    %v150 = vsel %vm148, %v129, 0
    %v153 = vsel %vm148, %v130, 0
    %v156 = vsel %vm148, %v131, 0
    %v159 = vsel %vm148, %v132, 0
    %v162 = vsel %vm148, %v133, 0
    %v165 = vsel %vm148, %v134, 0
    %v168 = vsel %vm148, %v135, 0
    %v171 = vsel %vm148, %v136, 0
    %vm173 = vcmask 1043456
    %vm174 = vcmask 1044480
    %v175 = vsel %vm173, 4294967295, 65535
    %v176 = vsel %vm174, %v175, 0
    %v178 = vand.u32 %v147, %v176
    %180 = vmatprep.subr.bf16.mxu0 0
    %181 = vmatpush1.bf16.msra.mxu0 %v178
    %182 = vmatprep.subr.bf16.mxu0 0
    %183 = vmatpush1.bf16.msra.mxu0 0
    %184 = vmatprep.subr.bf16.mxu0 0
    %185 = vmatpush1.bf16.msra.mxu0 0
    %186 = vmatprep.subr.bf16.mxu0 0
    %187 = vmatpush1.bf16.msra.mxu0 0
    %188 = vmatprep.subr.bf16.mxu0 0
    %189 = vmatpush1.bf16.msra.mxu0 0
    %190 = vmatprep.subr.bf16.mxu0 0
    %191 = vmatpush1.bf16.msra.mxu0 0
    %192 = vmatprep.subr.bf16.mxu0 0
    %193 = vmatpush1.bf16.msra.mxu0 0
    %194 = vmatprep.subr.bf16.mxu0 0
    %195 = vmatpush1.bf16.msra.mxu0 0
    %196 = vmatprep.subr.bf16.mxu0 0
    %197 = vmatpush1.bf16.msra.mxu0 0
    %198 = vmatprep.subr.bf16.mxu0 0
    %199 = vmatpush1.bf16.msra.mxu0 0
    %200 = vmatprep.subr.bf16.mxu0 0
    %201 = vmatpush1.bf16.msra.mxu0 0
    %202 = vmatprep.subr.bf16.mxu0 0
    %203 = vmatpush1.bf16.msra.mxu0 0
    %204 = vmatprep.subr.bf16.mxu0 0
    %205 = vmatpush1.bf16.msra.mxu0 0
    %206 = vmatprep.subr.bf16.mxu0 0
    %207 = vmatpush1.bf16.msra.mxu0 0
    %208 = vmatprep.subr.bf16.mxu0 0
    %209 = vmatpush1.bf16.msra.mxu0 0
    %210 = vmatprep.subr.bf16.mxu0 0
    %211 = vmatpush1.bf16.msra.mxu0 0
    %212 = vmatprep.mubr.bf16.mxu0 0
    %213 = vmatmul.mubr.bf16.gmra.mrb[0].mxu0 %v150
    %v214 = vpop.f32.mrb[0].mxu0
    %v215 = vadd.f32 %v141, %v214
    %v216 = vpop.f32.mrb[0].mxu0
    %v217 = vpop.f32.mrb[0].mxu0
    %v218 = vadd.f32 %v141, %v217
    %v219 = vpop.f32.mrb[0].mxu0
    %220 = vmatprep.mubr.bf16.mxu0 0
    %221 = vmatmul.mubr.bf16.gmra.mrb[0].mxu0 %v153
    %v222 = vpop.f32.mrb[0].mxu0
    %v223 = vadd.f32 %v141, %v222
    %v224 = vpop.f32.mrb[0].mxu0
    %v225 = vpop.f32.mrb[0].mxu0
    %v226 = vadd.f32 %v141, %v225
    %v227 = vpop.f32.mrb[0].mxu0
    %228 = vmatprep.mubr.bf16.mxu0 0
    %229 = vmatmul.mubr.bf16.gmra.mrb[0].mxu0 %v156
    %v230 = vpop.f32.mrb[0].mxu0
    %v231 = vadd.f32 %v141, %v230
    %v232 = vpop.f32.mrb[0].mxu0
    %v233 = vpop.f32.mrb[0].mxu0
    %v234 = vadd.f32 %v141, %v233
    %v235 = vpop.f32.mrb[0].mxu0
    %236 = vmatprep.mubr.bf16.mxu0 0
    %237 = vmatmul.mubr.bf16.gmra.mrb[0].mxu0 %v159
    %v238 = vpop.f32.mrb[0].mxu0
    %v239 = vadd.f32 %v141, %v238
    %v240 = vpop.f32.mrb[0].mxu0
    %v241 = vpop.f32.mrb[0].mxu0
    %v242 = vadd.f32 %v141, %v241
    %v243 = vpop.f32.mrb[0].mxu0
    %244 = vmatprep.mubr.bf16.mxu0 0
    %245 = vmatmul.mubr.bf16.gmra.mrb[0].mxu0 %v162
    %v246 = vpop.f32.mrb[0].mxu0
    %v247 = vadd.f32 %v141, %v246
    %v248 = vpop.f32.mrb[0].mxu0
    %v249 = vpop.f32.mrb[0].mxu0
    %v250 = vadd.f32 %v141, %v249
    %v251 = vpop.f32.mrb[0].mxu0
    %252 = vmatprep.mubr.bf16.mxu0 0
    %253 = vmatmul.mubr.bf16.gmra.mrb[0].mxu0 %v165
    %v254 = vpop.f32.mrb[0].mxu0
    %v255 = vadd.f32 %v141, %v254
    %v256 = vpop.f32.mrb[0].mxu0
    %v257 = vpop.f32.mrb[0].mxu0
    %v258 = vadd.f32 %v141, %v257
    %v259 = vpop.f32.mrb[0].mxu0
    %260 = vmatprep.mubr.bf16.mxu0 0
    %261 = vmatmul.mubr.bf16.gmra.mrb[0].mxu0 %v168
    %v262 = vpop.f32.mrb[0].mxu0
    %v263 = vadd.f32 %v141, %v262
    %v264 = vpop.f32.mrb[0].mxu0
    %v265 = vpop.f32.mrb[0].mxu0
    %v266 = vadd.f32 %v141, %v265
    %v267 = vpop.f32.mrb[0].mxu0
    %268 = vmatprep.mubr.bf16.mxu0 0
    %269 = vmatmul.mubr.bf16.gmra.mrb[0].mxu0 %v171
    %v270 = vpop.f32.mrb[0].mxu0
    %v271 = vadd.f32 %v141, %v270
    %v272 = vpop.f32.mrb[0].mxu0
    %v273 = vpop.f32.mrb[0].mxu0
    %v274 = vadd.f32 %v141, %v273
    %v275 = vpop.f32.mrb[0].mxu0
    %276 = vdwg.mxu0
    %v277 = vmax.f32 %v215, 0.0
    %v278 = vmax.f32 %v218, 0.0
    %v279 = vmax.f32 %v223, 0.0
    %v280 = vmax.f32 %v226, 0.0
    %v281 = vmax.f32 %v231, 0.0
    %v282 = vmax.f32 %v234, 0.0
    %v283 = vmax.f32 %v239, 0.0
    %v284 = vmax.f32 %v242, 0.0
    %v285 = vmax.f32 %v247, 0.0
    %v286 = vmax.f32 %v250, 0.0
    %v287 = vmax.f32 %v255, 0.0
    %v288 = vmax.f32 %v258, 0.0
    %v289 = vmax.f32 %v263, 0.0
    %v290 = vmax.f32 %v266, 0.0
    %v291 = vmax.f32 %v271, 0.0
    %v292 = vmax.f32 %v274, 0.0
    %v293 = vmin.f32 %v277, 6.0
    %v294 = vmin.f32 %v278, 6.0
    %v295 = vmin.f32 %v279, 6.0
    %v296 = vmin.f32 %v280, 6.0
    %v297 = vmin.f32 %v281, 6.0
    %v298 = vmin.f32 %v282, 6.0
    %v299 = vmin.f32 %v283, 6.0
    %v300 = vmin.f32 %v284, 6.0
    %v301 = vmin.f32 %v285, 6.0
    %v302 = vmin.f32 %v286, 6.0
    %v303 = vmin.f32 %v287, 6.0
    %v304 = vmin.f32 %v288, 6.0
    %v305 = vmin.f32 %v289, 6.0
    %v306 = vmin.f32 %v290, 6.0
    %v307 = vmin.f32 %v291, 6.0
    %v308 = vmin.f32 %v292, 6.0
    %309 = vmatprep.subr.mxu0 0.0
    %310 = vmatpush1.msra.mxu0 %v293
    %311 = vmatprep.subr.mxu0 0.0
    %312 = vmatpush1.msra.mxu0 %v294
    %313 = vmatprep.subr.mxu0 0.0
    %314 = vmatpush1.msra.mxu0 %v295
    %315 = vmatprep.subr.mxu0 0.0
    %316 = vmatpush1.msra.mxu0 %v296
    %317 = vmatprep.subr.mxu0 0.0
    %318 = vmatpush1.msra.mxu0 %v297
    %319 = vmatprep.subr.mxu0 0.0
    %320 = vmatpush1.msra.mxu0 %v298
    %321 = vmatprep.subr.mxu0 0.0
    %322 = vmatpush1.msra.mxu0 %v299
    %323 = vmatprep.subr.mxu0 0.0
    %324 = vmatpush1.msra.mxu0 %v300
    %325 = vmatprep.subr.mxu0 0.0
    %326 = vmatpush1.msra.mxu0 %v301
    %327 = vmatprep.subr.mxu0 0.0
    %328 = vmatpush1.msra.mxu0 %v302
    %329 = vmatprep.subr.mxu0 0.0
    %330 = vmatpush1.msra.mxu0 %v303
    %331 = vmatprep.subr.mxu0 0.0
    %332 = vmatpush1.msra.mxu0 %v304
    %333 = vmatprep.subr.mxu0 0.0
    %334 = vmatpush1.msra.mxu0 %v305
    %335 = vmatprep.subr.mxu0 0.0
    %336 = vmatpush1.msra.mxu0 %v306
    %337 = vmatprep.subr.mxu0 0.0
    %338 = vmatpush1.msra.mxu0 %v307
    %339 = vmatprep.subr.mxu0 0.0
    %340 = vmatpush1.msra.mxu0 %v308
    %341 = vmatprep.subr.mxu0 0.0
    %342 = vmatpush1.msra.mxu0 0.0
    %343 = vmatprep.subr.mxu0 0.0
    %344 = vmatpush1.msra.mxu0 0.0
    %345 = vmatprep.subr.mxu0 0.0
    %346 = vmatpush1.msra.mxu0 0.0
    %347 = vmatprep.subr.mxu0 0.0
    %348 = vmatpush1.msra.mxu0 0.0
    %349 = vmatprep.subr.mxu0 0.0
    %350 = vmatpush1.msra.mxu0 0.0
    %351 = vmatprep.subr.mxu0 0.0
    %352 = vmatpush1.msra.mxu0 0.0
    %353 = vmatprep.subr.mxu0 0.0
    %354 = vmatpush1.msra.mxu0 0.0
    %355 = vmatprep.subr.mxu0 0.0
    %356 = vmatpush1.msra.mxu0 0.0
    %357 = vmatprep.subr.mxu0 0.0
    %358 = vmatpush1.msra.mxu0 0.0
    %359 = vmatprep.subr.mxu0 0.0
    %360 = vmatpush1.msra.mxu0 0.0
    %361 = vmatprep.subr.mxu0 0.0
    %362 = vmatpush1.msra.mxu0 0.0
    %363 = vmatprep.subr.mxu0 0.0
    %364 = vmatpush1.msra.mxu0 0.0
    %365 = vmatprep.subr.mxu0 0.0
    %366 = vmatpush1.msra.mxu0 0.0
    %367 = vmatprep.subr.mxu0 0.0
    %368 = vmatpush1.msra.mxu0 0.0
    %369 = vmatprep.subr.mxu0 0.0
    %370 = vmatpush1.msra.mxu0 0.0
    %371 = vmatprep.subr.mxu0 0.0
    %372 = vmatpush1.msra.mxu0 0.0
    %373 = vmatprep.mubr.f32.mxu0 0.0
    %374 = vmatmul.mubr.f32.gmra.mrb[0].mxu0 %v107
    %v375 = vpop.f32.mrb[0].mxu0
    %v376 = vadd.f32 0.0, %v375
    %v377 = vpop.f32.mrb[0].mxu0
    %378 = vdwg.mxu0
    %v379 = vpack.c.bf16 %v376, %v376
    %v381 = vlaneseq
    %v382 = vshrl.u32 %v381, 7
    %v383 = vsub.s32 0, %v382
    %v384 = vrot.slane %v128, %v383
    %vm386 = vcmask 64512
    %v388 = vsel %vm386, %v379, 0
    %v391 = vsel %vm173, %v127, 0
    %393 = vmatprep.subr.bf16.mxu0 0
    %394 = vmatpush1.bf16.msra.mxu0 %v391
    %395 = vmatprep.subr.bf16.mxu0 0
    %396 = vmatpush1.bf16.msra.mxu0 0
    %397 = vmatprep.subr.bf16.mxu0 0
    %398 = vmatpush1.bf16.msra.mxu0 0
    %399 = vmatprep.subr.bf16.mxu0 0
    %400 = vmatpush1.bf16.msra.mxu0 0
    %401 = vmatprep.subr.bf16.mxu0 0
    %402 = vmatpush1.bf16.msra.mxu0 0
    %403 = vmatprep.subr.bf16.mxu0 0
    %404 = vmatpush1.bf16.msra.mxu0 0
    %405 = vmatprep.subr.bf16.mxu0 0
    %406 = vmatpush1.bf16.msra.mxu0 0
    %407 = vmatprep.subr.bf16.mxu0 0
    %408 = vmatpush1.bf16.msra.mxu0 0
    %409 = vmatprep.subr.bf16.mxu0 0
    %410 = vmatpush1.bf16.msra.mxu0 0
    %411 = vmatprep.subr.bf16.mxu0 0
    %412 = vmatpush1.bf16.msra.mxu0 0
    %413 = vmatprep.subr.bf16.mxu0 0
    %414 = vmatpush1.bf16.msra.mxu0 0
    %415 = vmatprep.subr.bf16.mxu0 0
    %416 = vmatpush1.bf16.msra.mxu0 0
    %417 = vmatprep.subr.bf16.mxu0 0
    %418 = vmatpush1.bf16.msra.mxu0 0
    %419 = vmatprep.subr.bf16.mxu0 0
    %420 = vmatpush1.bf16.msra.mxu0 0
    %421 = vmatprep.subr.bf16.mxu0 0
    %422 = vmatpush1.bf16.msra.mxu0 0
    %423 = vmatprep.subr.bf16.mxu0 0
    %424 = vmatpush1.bf16.msra.mxu0 0
    %425 = vmatprep.mubr.bf16.mxu0 0
    %426 = vmatmul.mubr.bf16.gmra.mrb[0].mxu0 %v388
    %v427 = vpop.f32.mrb[0].mxu0
    %v428 = vadd.f32 %v384, %v427
    %v429 = vpop.f32.mrb[0].mxu0
    %v430 = vpop.f32.mrb[0].mxu0
    %v431 = vpop.f32.mrb[0].mxu0
    %432 = vdwg.mxu0
    %v433 = vld [vmem:[%s1] sm:$0xff]
    %v434 = vld [vmem:[%s1 + $0x8] sm:$0xff]
    %v435 = vld [vmem:[%s1 + $0x10] sm:$0xff]
    %v436 = vld [vmem:[%s1 + $0x18] sm:$0xff]
    %v437 = vld [vmem:[%s1 + $0x20] sm:$0xff]
    %v438 = vld [vmem:[%s1 + $0x28] sm:$0xff]
    %v439 = vld [vmem:[%s1 + $0x30] sm:$0xff]
    %v440 = vld [vmem:[%s1 + $0x38] sm:$0xff]
    %v441 = vld [vmem:[%s1 + $0x40] sm:$0xff]
    %v442 = vld [vmem:[%s1 + $0x48] sm:$0xff]
    %v443 = vld [vmem:[%s1 + $0x50] sm:$0xff]
    %v444 = vld [vmem:[%s1 + $0x58] sm:$0xff]
    %v445 = vld [vmem:[%s1 + $0x60] sm:$0xff]
    %v446 = vld [vmem:[%s1 + $0x68] sm:$0xff]
    %v447 = vld [vmem:[%s1 + $0x70] sm:$0xff]
    %v448 = vld [vmem:[%s1 + $0x78] sm:$0xff]
    %v449 = vld [vmem:[%s8] sm:$0xf]
    %v450 = vld [vmem:[%s8 + $0x4] sm:$0x1]
    %v451 = vld [vmem:[%s9] sm:$0x1]
    %v452 = vld [vmem:[%s10] sm:$0xf]
    %v453 = vld [vmem:[%s11] sm:$0x1]
    %v454 = vpack.c.bf16 %v434, %v433
    %v455 = vpack.c.bf16 %v436, %v435
    %v456 = vpack.c.bf16 %v438, %v437
    %v457 = vpack.c.bf16 %v440, %v439
    %v458 = vpack.c.bf16 %v442, %v441
    %v459 = vpack.c.bf16 %v444, %v443
    %v460 = vpack.c.bf16 %v446, %v445
    %v461 = vpack.c.bf16 %v448, %v447
    %v463 = vlaneseq
    %v464 = vshrl.u32 %v463, 7
    %v465 = vsub.s32 0, %v464
    %v466 = vrot.slane %v451, %v465
    %v470 = vunpack.c.l.b16 %v449
    %v471 = vunpack.c.l.b16 %v450
    %v472 = vpack.c.b16 %v471, %v470
    %v474 = vsel %vm148, %v454, 0
    %v477 = vsel %vm148, %v455, 0
    %v480 = vsel %vm148, %v456, 0
    %v483 = vsel %vm148, %v457, 0
    %v486 = vsel %vm148, %v458, 0
    %v489 = vsel %vm148, %v459, 0
    %v492 = vsel %vm148, %v460, 0
    %v495 = vsel %vm148, %v461, 0
    %v498 = vand.u32 %v472, %v176
    %500 = vmatprep.subr.bf16.mxu0 0
    %501 = vmatpush1.bf16.msra.mxu0 %v498
    %502 = vmatprep.subr.bf16.mxu0 0
    %503 = vmatpush1.bf16.msra.mxu0 0
    %504 = vmatprep.subr.bf16.mxu0 0
    %505 = vmatpush1.bf16.msra.mxu0 0
    %506 = vmatprep.subr.bf16.mxu0 0
    %507 = vmatpush1.bf16.msra.mxu0 0
    %508 = vmatprep.subr.bf16.mxu0 0
    %509 = vmatpush1.bf16.msra.mxu0 0
    %510 = vmatprep.subr.bf16.mxu0 0
    %511 = vmatpush1.bf16.msra.mxu0 0
    %512 = vmatprep.subr.bf16.mxu0 0
    %513 = vmatpush1.bf16.msra.mxu0 0
    %514 = vmatprep.subr.bf16.mxu0 0
    %515 = vmatpush1.bf16.msra.mxu0 0
    %516 = vmatprep.subr.bf16.mxu0 0
    %517 = vmatpush1.bf16.msra.mxu0 0
    %518 = vmatprep.subr.bf16.mxu0 0
    %519 = vmatpush1.bf16.msra.mxu0 0
    %520 = vmatprep.subr.bf16.mxu0 0
    %521 = vmatpush1.bf16.msra.mxu0 0
    %522 = vmatprep.subr.bf16.mxu0 0
    %523 = vmatpush1.bf16.msra.mxu0 0
    %524 = vmatprep.subr.bf16.mxu0 0
    %525 = vmatpush1.bf16.msra.mxu0 0
    %526 = vmatprep.subr.bf16.mxu0 0
    %527 = vmatpush1.bf16.msra.mxu0 0
    %528 = vmatprep.subr.bf16.mxu0 0
    %529 = vmatpush1.bf16.msra.mxu0 0
    %530 = vmatprep.subr.bf16.mxu0 0
    %531 = vmatpush1.bf16.msra.mxu0 0
    %532 = vmatprep.mubr.bf16.mxu0 0
    %533 = vmatmul.mubr.bf16.gmra.mrb[0].mxu0 %v474
    %v534 = vpop.f32.mrb[0].mxu0
    %v535 = vadd.f32 %v466, %v534
    %v536 = vpop.f32.mrb[0].mxu0
    %v537 = vpop.f32.mrb[0].mxu0
    %v538 = vadd.f32 %v466, %v537
    %v539 = vpop.f32.mrb[0].mxu0
    %540 = vmatprep.mubr.bf16.mxu0 0
    %541 = vmatmul.mubr.bf16.gmra.mrb[0].mxu0 %v477
    %v542 = vpop.f32.mrb[0].mxu0
    %v543 = vadd.f32 %v466, %v542
    %v544 = vpop.f32.mrb[0].mxu0
    %v545 = vpop.f32.mrb[0].mxu0
    %v546 = vadd.f32 %v466, %v545
    %v547 = vpop.f32.mrb[0].mxu0
    %548 = vmatprep.mubr.bf16.mxu0 0
    %549 = vmatmul.mubr.bf16.gmra.mrb[0].mxu0 %v480
    %v550 = vpop.f32.mrb[0].mxu0
    %v551 = vadd.f32 %v466, %v550
    %v552 = vpop.f32.mrb[0].mxu0
    %v553 = vpop.f32.mrb[0].mxu0
    %v554 = vadd.f32 %v466, %v553
    %v555 = vpop.f32.mrb[0].mxu0
    %556 = vmatprep.mubr.bf16.mxu0 0
    %557 = vmatmul.mubr.bf16.gmra.mrb[0].mxu0 %v483
    %v558 = vpop.f32.mrb[0].mxu0
    %v559 = vadd.f32 %v466, %v558
    %v560 = vpop.f32.mrb[0].mxu0
    %v561 = vpop.f32.mrb[0].mxu0
    %v562 = vadd.f32 %v466, %v561
    %v563 = vpop.f32.mrb[0].mxu0
    %564 = vmatprep.mubr.bf16.mxu0 0
    %565 = vmatmul.mubr.bf16.gmra.mrb[0].mxu0 %v486
    %v566 = vpop.f32.mrb[0].mxu0
    %v567 = vadd.f32 %v466, %v566
    %v568 = vpop.f32.mrb[0].mxu0
    %v569 = vpop.f32.mrb[0].mxu0
    %v570 = vadd.f32 %v466, %v569
    %v571 = vpop.f32.mrb[0].mxu0
    %572 = vmatprep.mubr.bf16.mxu0 0
    %573 = vmatmul.mubr.bf16.gmra.mrb[0].mxu0 %v489
    %v574 = vpop.f32.mrb[0].mxu0
    %v575 = vadd.f32 %v466, %v574
    %v576 = vpop.f32.mrb[0].mxu0
    %v577 = vpop.f32.mrb[0].mxu0
    %v578 = vadd.f32 %v466, %v577
    %v579 = vpop.f32.mrb[0].mxu0
    %580 = vmatprep.mubr.bf16.mxu0 0
    %581 = vmatmul.mubr.bf16.gmra.mrb[0].mxu0 %v492
    %v582 = vpop.f32.mrb[0].mxu0
    %v583 = vadd.f32 %v466, %v582
    %v584 = vpop.f32.mrb[0].mxu0
    %v585 = vpop.f32.mrb[0].mxu0
    %v586 = vadd.f32 %v466, %v585
    %v587 = vpop.f32.mrb[0].mxu0
    %588 = vmatprep.mubr.bf16.mxu0 0
    %589 = vmatmul.mubr.bf16.gmra.mrb[0].mxu0 %v495
    %v590 = vpop.f32.mrb[0].mxu0
    %v591 = vadd.f32 %v466, %v590
    %v592 = vpop.f32.mrb[0].mxu0
    %v593 = vpop.f32.mrb[0].mxu0
    %v594 = vadd.f32 %v466, %v593
    %v595 = vpop.f32.mrb[0].mxu0
    %596 = vdwg.mxu0
    %v597 = vmax.f32 %v535, 0.0
    %v598 = vmax.f32 %v538, 0.0
    %v599 = vmax.f32 %v543, 0.0
    %v600 = vmax.f32 %v546, 0.0
    %v601 = vmax.f32 %v551, 0.0
    %v602 = vmax.f32 %v554, 0.0
    %v603 = vmax.f32 %v559, 0.0
    %v604 = vmax.f32 %v562, 0.0
    %v605 = vmax.f32 %v567, 0.0
    %v606 = vmax.f32 %v570, 0.0
    %v607 = vmax.f32 %v575, 0.0
    %v608 = vmax.f32 %v578, 0.0
    %v609 = vmax.f32 %v583, 0.0
    %v610 = vmax.f32 %v586, 0.0
    %v611 = vmax.f32 %v591, 0.0
    %v612 = vmax.f32 %v594, 0.0
    %v613 = vmin.f32 %v597, 6.0
    %v614 = vmin.f32 %v598, 6.0
    %v615 = vmin.f32 %v599, 6.0
    %v616 = vmin.f32 %v600, 6.0
    %v617 = vmin.f32 %v601, 6.0
    %v618 = vmin.f32 %v602, 6.0
    %v619 = vmin.f32 %v603, 6.0
    %v620 = vmin.f32 %v604, 6.0
    %v621 = vmin.f32 %v605, 6.0
    %v622 = vmin.f32 %v606, 6.0
    %v623 = vmin.f32 %v607, 6.0
    %v624 = vmin.f32 %v608, 6.0
    %v625 = vmin.f32 %v609, 6.0
    %v626 = vmin.f32 %v610, 6.0
    %v627 = vmin.f32 %v611, 6.0
    %v628 = vmin.f32 %v612, 6.0
    %629 = vmatprep.subr.mxu0 0.0
    %630 = vmatpush1.msra.mxu0 %v613
    %631 = vmatprep.subr.mxu0 0.0
    %632 = vmatpush1.msra.mxu0 %v614
    %633 = vmatprep.subr.mxu0 0.0
    %634 = vmatpush1.msra.mxu0 %v615
    %635 = vmatprep.subr.mxu0 0.0
    %636 = vmatpush1.msra.mxu0 %v616
    %637 = vmatprep.subr.mxu0 0.0
    %638 = vmatpush1.msra.mxu0 %v617
    %639 = vmatprep.subr.mxu0 0.0
    %640 = vmatpush1.msra.mxu0 %v618
    %641 = vmatprep.subr.mxu0 0.0
    %642 = vmatpush1.msra.mxu0 %v619
    %643 = vmatprep.subr.mxu0 0.0
    %644 = vmatpush1.msra.mxu0 %v620
    %645 = vmatprep.subr.mxu0 0.0
    %646 = vmatpush1.msra.mxu0 %v621
    %647 = vmatprep.subr.mxu0 0.0
    %648 = vmatpush1.msra.mxu0 %v622
    %649 = vmatprep.subr.mxu0 0.0
    %650 = vmatpush1.msra.mxu0 %v623
    %651 = vmatprep.subr.mxu0 0.0
    %652 = vmatpush1.msra.mxu0 %v624
    %653 = vmatprep.subr.mxu0 0.0
    %654 = vmatpush1.msra.mxu0 %v625
    %655 = vmatprep.subr.mxu0 0.0
    %656 = vmatpush1.msra.mxu0 %v626
    %657 = vmatprep.subr.mxu0 0.0
    %658 = vmatpush1.msra.mxu0 %v627
    %659 = vmatprep.subr.mxu0 0.0
    %660 = vmatpush1.msra.mxu0 %v628
    %661 = vmatprep.subr.mxu0 0.0
    %662 = vmatpush1.msra.mxu0 0.0
    %663 = vmatprep.subr.mxu0 0.0
    %664 = vmatpush1.msra.mxu0 0.0
    %665 = vmatprep.subr.mxu0 0.0
    %666 = vmatpush1.msra.mxu0 0.0
    %667 = vmatprep.subr.mxu0 0.0
    %668 = vmatpush1.msra.mxu0 0.0
    %669 = vmatprep.subr.mxu0 0.0
    %670 = vmatpush1.msra.mxu0 0.0
    %671 = vmatprep.subr.mxu0 0.0
    %672 = vmatpush1.msra.mxu0 0.0
    %673 = vmatprep.subr.mxu0 0.0
    %674 = vmatpush1.msra.mxu0 0.0
    %675 = vmatprep.subr.mxu0 0.0
    %676 = vmatpush1.msra.mxu0 0.0
    %677 = vmatprep.subr.mxu0 0.0
    %678 = vmatpush1.msra.mxu0 0.0
    %679 = vmatprep.subr.mxu0 0.0
    %680 = vmatpush1.msra.mxu0 0.0
    %681 = vmatprep.subr.mxu0 0.0
    %682 = vmatpush1.msra.mxu0 0.0
    %683 = vmatprep.subr.mxu0 0.0
    %684 = vmatpush1.msra.mxu0 0.0
    %685 = vmatprep.subr.mxu0 0.0
    %686 = vmatpush1.msra.mxu0 0.0
    %687 = vmatprep.subr.mxu0 0.0
    %688 = vmatpush1.msra.mxu0 0.0
    %689 = vmatprep.subr.mxu0 0.0
    %690 = vmatpush1.msra.mxu0 0.0
    %691 = vmatprep.subr.mxu0 0.0
    %692 = vmatpush1.msra.mxu0 0.0
    %693 = vmatprep.mubr.f32.mxu0 0.0
    %694 = vmatmul.mubr.f32.gmra.mrb[0].mxu0 %v107
    %v695 = vpop.f32.mrb[0].mxu0
    %v696 = vadd.f32 0.0, %v695
    %v697 = vpop.f32.mrb[0].mxu0
    %698 = vdwg.mxu0
    %v699 = vpack.c.bf16 %v696, %v696
    %v701 = vlaneseq
    %v702 = vshrl.u32 %v701, 7
    %v703 = vsub.s32 0, %v702
    %v704 = vrot.slane %v453, %v703
    %v707 = vsel %vm386, %v699, 0
    %v710 = vsel %vm173, %v452, 0
    %712 = vmatprep.subr.bf16.mxu0 0
    %713 = vmatpush1.bf16.msra.mxu0 %v710
    %714 = vmatprep.subr.bf16.mxu0 0
    %715 = vmatpush1.bf16.msra.mxu0 0
    %716 = vmatprep.subr.bf16.mxu0 0
    %717 = vmatpush1.bf16.msra.mxu0 0
    %718 = vmatprep.subr.bf16.mxu0 0
    %719 = vmatpush1.bf16.msra.mxu0 0
    %720 = vmatprep.subr.bf16.mxu0 0
    %721 = vmatpush1.bf16.msra.mxu0 0
    %722 = vmatprep.subr.bf16.mxu0 0
    %723 = vmatpush1.bf16.msra.mxu0 0
    %724 = vmatprep.subr.bf16.mxu0 0
    %725 = vmatpush1.bf16.msra.mxu0 0
    %726 = vmatprep.subr.bf16.mxu0 0
    %727 = vmatpush1.bf16.msra.mxu0 0
    %728 = vmatprep.subr.bf16.mxu0 0
    %729 = vmatpush1.bf16.msra.mxu0 0
    %730 = vmatprep.subr.bf16.mxu0 0
    %731 = vmatpush1.bf16.msra.mxu0 0
    %732 = vmatprep.subr.bf16.mxu0 0
    %733 = vmatpush1.bf16.msra.mxu0 0
    %734 = vmatprep.subr.bf16.mxu0 0
    %735 = vmatpush1.bf16.msra.mxu0 0
    %736 = vmatprep.subr.bf16.mxu0 0
    %737 = vmatpush1.bf16.msra.mxu0 0
    %738 = vmatprep.subr.bf16.mxu0 0
    %739 = vmatpush1.bf16.msra.mxu0 0
    %740 = vmatprep.subr.bf16.mxu0 0
    %741 = vmatpush1.bf16.msra.mxu0 0
    %742 = vmatprep.subr.bf16.mxu0 0
    %743 = vmatpush1.bf16.msra.mxu0 0
    %744 = vmatprep.mubr.bf16.mxu0 0
    %745 = vmatmul.mubr.bf16.gmra.mrb[0].mxu0 %v707
    %v746 = vpop.f32.mrb[0].mxu0
    %v747 = vadd.f32 %v704, %v746
    %v748 = vpop.f32.mrb[0].mxu0
    %v749 = vpop.f32.mrb[0].mxu0
    %v750 = vpop.f32.mrb[0].mxu0
    %751 = vdwg.mxu0
    %v752 = vld [vmem:[%s3] sm:$0x3]
    %v753 = vld [vmem:[%s12] sm:$0xf]
    %v754 = vld [vmem:[%s12 + $0x4] sm:$0xf]
    %v755 = vld [vmem:[%s12 + $0x8] sm:$0xf]
    %v756 = vld [vmem:[%s12 + $0xc] sm:$0xf]
    %v757 = vpack.c.bf16 %v752, %v752
    %v758 = vld [vmem:[%s13] sm:$0x1]
    %v760 = vlaneseq
    %v761 = vshrl.u32 %v760, 7
    %v762 = vsub.s32 0, %v761
    %v763 = vrot.slane %v758, %v762
    %v769 = vunpack.c.l.b16 %v753
    %v770 = vunpack.c.l.b16 %v754
    %v771 = vunpack.c.l.b16 %v755
    %v772 = vunpack.c.l.b16 %v756
    %v773 = vpack.c.b16 %v770, %v769
    %v774 = vpack.c.b16 %v772, %v771
    %vm777 = vcmask 261120
    %v779 = vsel %vm777, %v757, 0
    %781 = vmatprep.subr.bf16.mxu0 0
    %782 = vmatpush1.bf16.msra.mxu0 %v773
    %783 = vmatprep.subr.bf16.mxu0 0
    %784 = vmatpush1.bf16.msra.mxu0 %v774
    %785 = vmatprep.subr.bf16.mxu0 0
    %786 = vmatpush1.bf16.msra.mxu0 0
    %787 = vmatprep.subr.bf16.mxu0 0
    %788 = vmatpush1.bf16.msra.mxu0 0
    %789 = vmatprep.subr.bf16.mxu0 0
    %790 = vmatpush1.bf16.msra.mxu0 0
    %791 = vmatprep.subr.bf16.mxu0 0
    %792 = vmatpush1.bf16.msra.mxu0 0
    %793 = vmatprep.subr.bf16.mxu0 0
    %794 = vmatpush1.bf16.msra.mxu0 0
    %795 = vmatprep.subr.bf16.mxu0 0
    %796 = vmatpush1.bf16.msra.mxu0 0
    %797 = vmatprep.subr.bf16.mxu0 0
    %798 = vmatpush1.bf16.msra.mxu0 0
    %799 = vmatprep.subr.bf16.mxu0 0
    %800 = vmatpush1.bf16.msra.mxu0 0
    %801 = vmatprep.subr.bf16.mxu0 0
    %802 = vmatpush1.bf16.msra.mxu0 0
    %803 = vmatprep.subr.bf16.mxu0 0
    %804 = vmatpush1.bf16.msra.mxu0 0
    %805 = vmatprep.subr.bf16.mxu0 0
    %806 = vmatpush1.bf16.msra.mxu0 0
    %807 = vmatprep.subr.bf16.mxu0 0
    %808 = vmatpush1.bf16.msra.mxu0 0
    %809 = vmatprep.subr.bf16.mxu0 0
    %810 = vmatpush1.bf16.msra.mxu0 0
    %811 = vmatprep.subr.bf16.mxu0 0
    %812 = vmatpush1.bf16.msra.mxu0 0
    %813 = vmatprep.mubr.bf16.mxu0 0
    %814 = vmatmul.mubr.bf16.gmra.mrb[0].mxu0 %v779
    %v815 = vpop.f32.mrb[0].mxu0
    %v816 = vadd.f32 %v763, %v815
    %v817 = vpop.f32.mrb[0].mxu0
    %v818 = vpop.f32.mrb[0].mxu0
    %v819 = vpop.f32.mrb[0].mxu0
    %820 = vdwg.mxu0
    %v821 = vmax.f32 %v816, 0.0
    %v822 = vld [vmem:[%s14] sm:$0xff]
    %v823 = vld [vmem:[%s14 + $0x8] sm:$0xff]
    %v824 = vld [vmem:[%s14 + $0x10] sm:$0xff]
    %v825 = vld [vmem:[%s14 + $0x18] sm:$0xff]
    %v826 = vld [vmem:[%s14 + $0x20] sm:$0xff]
    %v827 = vld [vmem:[%s14 + $0x28] sm:$0xff]
    %v828 = vld [vmem:[%s14 + $0x30] sm:$0xff]
    %v829 = vld [vmem:[%s14 + $0x38] sm:$0xff]
    %v830 = vld [vmem:[%s14 + $0x40] sm:$0xff]
    %v831 = vld [vmem:[%s14 + $0x48] sm:$0xff]
    %v832 = vld [vmem:[%s14 + $0x50] sm:$0xff]
    %v833 = vld [vmem:[%s14 + $0x58] sm:$0xff]
    %v834 = vld [vmem:[%s14 + $0x60] sm:$0xff]
    %v835 = vld [vmem:[%s14 + $0x68] sm:$0xff]
    %v836 = vld [vmem:[%s14 + $0x70] sm:$0xff]
    %v837 = vld [vmem:[%s14 + $0x78] sm:$0xff]
    %v838 = vpack.c.bf16 %v428, %v428
    %v839 = vld [vmem:[#allocation2] sm:$0xff]
    %v840 = vld [vmem:[#allocation2 + $0x8] sm:$0xff]
    %v841 = vld [vmem:[#allocation2 + $0x10] sm:$0xff]
    %v842 = vld [vmem:[#allocation2 + $0x18] sm:$0xff]
    %v843 = vld [vmem:[#allocation2 + $0x20] sm:$0xff]
    %v844 = vld [vmem:[#allocation2 + $0x28] sm:$0xff]
    %v845 = vld [vmem:[#allocation2 + $0x30] sm:$0xff]
    %v846 = vld [vmem:[#allocation2 + $0x38] sm:$0xff]
    %v847 = vld [vmem:[#allocation2 + $0x40] sm:$0xff]
    %v848 = vld [vmem:[#allocation2 + $0x48] sm:$0xff]
    %v849 = vld [vmem:[#allocation2 + $0x50] sm:$0xff]
    %v850 = vld [vmem:[#allocation2 + $0x58] sm:$0xff]
    %v851 = vld [vmem:[#allocation2 + $0x60] sm:$0xff]
    %v852 = vld [vmem:[#allocation2 + $0x68] sm:$0xff]
    %v853 = vld [vmem:[#allocation2 + $0x70] sm:$0xff]
    %v854 = vld [vmem:[#allocation2 + $0x78] sm:$0xff]
    %v855 = vpack.c.bf16 %v747, %v747
    %v872 = vunpack.c.l.b16 %v839
    %v873 = vunpack.c.h.b16 %v839
    %v874 = vunpack.c.l.b16 %v840
    %v875 = vunpack.c.h.b16 %v840
    %v876 = vunpack.c.l.b16 %v841
    %v877 = vunpack.c.h.b16 %v841
    %v878 = vunpack.c.l.b16 %v842
    %v879 = vunpack.c.h.b16 %v842
    %v880 = vunpack.c.l.b16 %v843
    %v881 = vunpack.c.h.b16 %v843
    %v882 = vunpack.c.l.b16 %v844
    %v883 = vunpack.c.h.b16 %v844
    %v884 = vunpack.c.l.b16 %v845
    %v885 = vunpack.c.h.b16 %v845
    %v886 = vunpack.c.l.b16 %v846
    %v887 = vunpack.c.h.b16 %v846
    %v888 = vunpack.c.l.b16 %v847
    %v889 = vunpack.c.h.b16 %v847
    %v890 = vunpack.c.l.b16 %v848
    %v891 = vunpack.c.h.b16 %v848
    %v892 = vunpack.c.l.b16 %v849
    %v893 = vunpack.c.h.b16 %v849
    %v894 = vunpack.c.l.b16 %v850
    %v895 = vunpack.c.h.b16 %v850
    %v896 = vunpack.c.l.b16 %v851
    %v897 = vunpack.c.h.b16 %v851
    %v898 = vunpack.c.l.b16 %v852
    %v899 = vunpack.c.h.b16 %v852
    %v900 = vunpack.c.l.b16 %v853
    %v901 = vunpack.c.h.b16 %v853
    %v902 = vunpack.c.l.b16 %v854
    %v903 = vunpack.c.h.b16 %v854
    %v904 = vpack.c.b16 %v876, %v872
    %v905 = vpack.c.b16 %v877, %v873
    %v906 = vpack.c.b16 %v878, %v874
    %v907 = vpack.c.b16 %v879, %v875
    %v908 = vpack.c.b16 %v884, %v880
    %v909 = vpack.c.b16 %v885, %v881
    %v910 = vpack.c.b16 %v886, %v882
    %v911 = vpack.c.b16 %v887, %v883
    %v912 = vpack.c.b16 %v892, %v888
    %v913 = vpack.c.b16 %v893, %v889
    %v914 = vpack.c.b16 %v894, %v890
    %v915 = vpack.c.b16 %v895, %v891
    %v916 = vpack.c.b16 %v900, %v896
    %v917 = vpack.c.b16 %v901, %v897
    %v918 = vpack.c.b16 %v902, %v898
    %v919 = vpack.c.b16 %v903, %v899
    %vm936 = vcmask 523264
    %v938 = vsel %vm936, %v855, 0
    %940 = vmatprep.subr.bf16.mxu0 %v905
    %941 = vmatpush1.bf16.msra.mxu0 %v904
    %942 = vmatprep.subr.bf16.mxu0 %v909
    %943 = vmatpush1.bf16.msra.mxu0 %v908
    %944 = vmatprep.subr.bf16.mxu0 %v913
    %945 = vmatpush1.bf16.msra.mxu0 %v912
    %946 = vmatprep.subr.bf16.mxu0 %v917
    %947 = vmatpush1.bf16.msra.mxu0 %v916
    %948 = vmatprep.subr.bf16.mxu0 0
    %949 = vmatpush1.bf16.msra.mxu0 0
    %950 = vmatprep.subr.bf16.mxu0 0
    %951 = vmatpush1.bf16.msra.mxu0 0
    %952 = vmatprep.subr.bf16.mxu0 0
    %953 = vmatpush1.bf16.msra.mxu0 0
    %954 = vmatprep.subr.bf16.mxu0 0
    %955 = vmatpush1.bf16.msra.mxu0 0
    %956 = vmatprep.subr.bf16.mxu0 0
    %957 = vmatpush1.bf16.msra.mxu0 0
    %958 = vmatprep.subr.bf16.mxu0 0
    %959 = vmatpush1.bf16.msra.mxu0 0
    %960 = vmatprep.subr.bf16.mxu0 0
    %961 = vmatpush1.bf16.msra.mxu0 0
    %962 = vmatprep.subr.bf16.mxu0 0
    %963 = vmatpush1.bf16.msra.mxu0 0
    %964 = vmatprep.subr.bf16.mxu0 0
    %965 = vmatpush1.bf16.msra.mxu0 0
    %966 = vmatprep.subr.bf16.mxu0 0
    %967 = vmatpush1.bf16.msra.mxu0 0
    %968 = vmatprep.subr.bf16.mxu0 0
    %969 = vmatpush1.bf16.msra.mxu0 0
    %970 = vmatprep.subr.bf16.mxu0 0
    %971 = vmatpush1.bf16.msra.mxu0 0
    %972 = vmatprep.mubr.bf16.mxu0 0
    %973 = vmatmul.mubr.bf16.gmra.mrb[0].mxu0 %v938
    %v974 = vpop.f32.mrb[0].mxu0
    %v975 = vadd.f32 0.0, %v974
    %v976 = vpop.f32.mrb[0].mxu0
    %v977 = vadd.f32 0.0, %v976
    %v978 = vpop.f32.mrb[0].mxu0
    %v979 = vpop.f32.mrb[0].mxu0
    %980 = vdwg.mxu0
    %981 = vmatprep.subr.bf16.mxu0 %v907
    %982 = vmatpush1.bf16.msra.mxu0 %v906
    %983 = vmatprep.subr.bf16.mxu0 %v911
    %984 = vmatpush1.bf16.msra.mxu0 %v910
    %985 = vmatprep.subr.bf16.mxu0 %v915
    %986 = vmatpush1.bf16.msra.mxu0 %v914
    %987 = vmatprep.subr.bf16.mxu0 %v919
    %988 = vmatpush1.bf16.msra.mxu0 %v918
    %989 = vmatprep.subr.bf16.mxu0 0
    %990 = vmatpush1.bf16.msra.mxu0 0
    %991 = vmatprep.subr.bf16.mxu0 0
    %992 = vmatpush1.bf16.msra.mxu0 0
    %993 = vmatprep.subr.bf16.mxu0 0
    %994 = vmatpush1.bf16.msra.mxu0 0
    %995 = vmatprep.subr.bf16.mxu0 0
    %996 = vmatpush1.bf16.msra.mxu0 0
    %997 = vmatprep.subr.bf16.mxu0 0
    %998 = vmatpush1.bf16.msra.mxu0 0
    %999 = vmatprep.subr.bf16.mxu0 0
    %1000 = vmatpush1.bf16.msra.mxu0 0
    %1001 = vmatprep.subr.bf16.mxu0 0
    %1002 = vmatpush1.bf16.msra.mxu0 0
    %1003 = vmatprep.subr.bf16.mxu0 0
    %1004 = vmatpush1.bf16.msra.mxu0 0
    %1005 = vmatprep.subr.bf16.mxu0 0
    %1006 = vmatpush1.bf16.msra.mxu0 0
    %1007 = vmatprep.subr.bf16.mxu0 0
    %1008 = vmatpush1.bf16.msra.mxu0 0
    %1009 = vmatprep.subr.bf16.mxu0 0
    %1010 = vmatpush1.bf16.msra.mxu0 0
    %1011 = vmatprep.subr.bf16.mxu0 0
    %1012 = vmatpush1.bf16.msra.mxu0 0
    %1013 = vmatprep.mubr.bf16.mxu0 0
    %1014 = vmatmul.mubr.bf16.gmra.mrb[0].mxu0 %v938
    %v1015 = vpop.f32.mrb[0].mxu0
    %v1016 = vadd.f32 0.0, %v1015
    %v1017 = vpop.f32.mrb[0].mxu0
    %v1018 = vadd.f32 0.0, %v1017
    %v1019 = vpop.f32.mrb[0].mxu0
    %v1020 = vpop.f32.mrb[0].mxu0
    %1021 = vdwg.mxu0
    %v1038 = vunpack.c.l.b16 %v822
    %v1039 = vunpack.c.h.b16 %v822
    %v1040 = vunpack.c.l.b16 %v823
    %v1041 = vunpack.c.h.b16 %v823
    %v1042 = vunpack.c.l.b16 %v824
    %v1043 = vunpack.c.h.b16 %v824
    %v1044 = vunpack.c.l.b16 %v825
    %v1045 = vunpack.c.h.b16 %v825
    %v1046 = vunpack.c.l.b16 %v826
    %v1047 = vunpack.c.h.b16 %v826
    %v1048 = vunpack.c.l.b16 %v827
    %v1049 = vunpack.c.h.b16 %v827
    %v1050 = vunpack.c.l.b16 %v828
    %v1051 = vunpack.c.h.b16 %v828
    %v1052 = vunpack.c.l.b16 %v829
    %v1053 = vunpack.c.h.b16 %v829
    %v1054 = vunpack.c.l.b16 %v830
    %v1055 = vunpack.c.h.b16 %v830
    %v1056 = vunpack.c.l.b16 %v831
    %v1057 = vunpack.c.h.b16 %v831
    %v1058 = vunpack.c.l.b16 %v832
    %v1059 = vunpack.c.h.b16 %v832
    %v1060 = vunpack.c.l.b16 %v833
    %v1061 = vunpack.c.h.b16 %v833
    %v1062 = vunpack.c.l.b16 %v834
    %v1063 = vunpack.c.h.b16 %v834
    %v1064 = vunpack.c.l.b16 %v835
    %v1065 = vunpack.c.h.b16 %v835
    %v1066 = vunpack.c.l.b16 %v836
    %v1067 = vunpack.c.h.b16 %v836
    %v1068 = vunpack.c.l.b16 %v837
    %v1069 = vunpack.c.h.b16 %v837
    %v1070 = vpack.c.b16 %v1042, %v1038
    %v1071 = vpack.c.b16 %v1043, %v1039
    %v1072 = vpack.c.b16 %v1044, %v1040
    %v1073 = vpack.c.b16 %v1045, %v1041
    %v1074 = vpack.c.b16 %v1050, %v1046
    %v1075 = vpack.c.b16 %v1051, %v1047
    %v1076 = vpack.c.b16 %v1052, %v1048
    %v1077 = vpack.c.b16 %v1053, %v1049
    %v1078 = vpack.c.b16 %v1058, %v1054
    %v1079 = vpack.c.b16 %v1059, %v1055
    %v1080 = vpack.c.b16 %v1060, %v1056
    %v1081 = vpack.c.b16 %v1061, %v1057
    %v1082 = vpack.c.b16 %v1066, %v1062
    %v1083 = vpack.c.b16 %v1067, %v1063
    %v1084 = vpack.c.b16 %v1068, %v1064
    %v1085 = vpack.c.b16 %v1069, %v1065
    %v1103 = vsel %vm936, %v838, 0
    %1105 = vmatprep.subr.bf16.mxu0 %v1071
    %1106 = vmatpush1.bf16.msra.mxu0 %v1070
    %1107 = vmatprep.subr.bf16.mxu0 %v1075
    %1108 = vmatpush1.bf16.msra.mxu0 %v1074
    %1109 = vmatprep.subr.bf16.mxu0 %v1079
    %1110 = vmatpush1.bf16.msra.mxu0 %v1078
    %1111 = vmatprep.subr.bf16.mxu0 %v1083
    %1112 = vmatpush1.bf16.msra.mxu0 %v1082
    %1113 = vmatprep.subr.bf16.mxu0 0
    %1114 = vmatpush1.bf16.msra.mxu0 0
    %1115 = vmatprep.subr.bf16.mxu0 0
    %1116 = vmatpush1.bf16.msra.mxu0 0
    %1117 = vmatprep.subr.bf16.mxu0 0
    %1118 = vmatpush1.bf16.msra.mxu0 0
    %1119 = vmatprep.subr.bf16.mxu0 0
    %1120 = vmatpush1.bf16.msra.mxu0 0
    %1121 = vmatprep.subr.bf16.mxu0 0
    %1122 = vmatpush1.bf16.msra.mxu0 0
    %1123 = vmatprep.subr.bf16.mxu0 0
    %1124 = vmatpush1.bf16.msra.mxu0 0
    %1125 = vmatprep.subr.bf16.mxu0 0
    %1126 = vmatpush1.bf16.msra.mxu0 0
    %1127 = vmatprep.subr.bf16.mxu0 0
    %1128 = vmatpush1.bf16.msra.mxu0 0
    %1129 = vmatprep.subr.bf16.mxu0 0
    %1130 = vmatpush1.bf16.msra.mxu0 0
    %1131 = vmatprep.subr.bf16.mxu0 0
    %1132 = vmatpush1.bf16.msra.mxu0 0
    %1133 = vmatprep.subr.bf16.mxu0 0
    %1134 = vmatpush1.bf16.msra.mxu0 0
    %1135 = vmatprep.subr.bf16.mxu0 0
    %1136 = vmatpush1.bf16.msra.mxu0 0
    %1137 = vmatprep.mubr.bf16.mxu0 0
    %1138 = vmatmul.mubr.bf16.gmra.mrb[0].mxu0 %v1103
    %v1139 = vpop.f32.mrb[0].mxu0
    %v1140 = vadd.f32 %v975, %v1139
    %v1141 = vpop.f32.mrb[0].mxu0
    %v1142 = vadd.f32 %v977, %v1141
    %v1143 = vpop.f32.mrb[0].mxu0
    %v1144 = vpop.f32.mrb[0].mxu0
    %1145 = vdwg.mxu0
    %1146 = vmatprep.subr.bf16.mxu0 %v1073
    %1147 = vmatpush1.bf16.msra.mxu0 %v1072
    %1148 = vmatprep.subr.bf16.mxu0 %v1077
    %1149 = vmatpush1.bf16.msra.mxu0 %v1076
    %1150 = vmatprep.subr.bf16.mxu0 %v1081
    %1151 = vmatpush1.bf16.msra.mxu0 %v1080
    %1152 = vmatprep.subr.bf16.mxu0 %v1085
    %1153 = vmatpush1.bf16.msra.mxu0 %v1084
    %1154 = vmatprep.subr.bf16.mxu0 0
    %1155 = vmatpush1.bf16.msra.mxu0 0
    %1156 = vmatprep.subr.bf16.mxu0 0
    %1157 = vmatpush1.bf16.msra.mxu0 0
    %1158 = vmatprep.subr.bf16.mxu0 0
    %1159 = vmatpush1.bf16.msra.mxu0 0
    %1160 = vmatprep.subr.bf16.mxu0 0
    %1161 = vmatpush1.bf16.msra.mxu0 0
    %1162 = vmatprep.subr.bf16.mxu0 0
    %1163 = vmatpush1.bf16.msra.mxu0 0
    %1164 = vmatprep.subr.bf16.mxu0 0
    %1165 = vmatpush1.bf16.msra.mxu0 0
    %1166 = vmatprep.subr.bf16.mxu0 0
    %1167 = vmatpush1.bf16.msra.mxu0 0
    %1168 = vmatprep.subr.bf16.mxu0 0
    %1169 = vmatpush1.bf16.msra.mxu0 0
    %1170 = vmatprep.subr.bf16.mxu0 0
    %1171 = vmatpush1.bf16.msra.mxu0 0
    %1172 = vmatprep.subr.bf16.mxu0 0
    %1173 = vmatpush1.bf16.msra.mxu0 0
    %1174 = vmatprep.subr.bf16.mxu0 0
    %1175 = vmatpush1.bf16.msra.mxu0 0
    %1176 = vmatprep.subr.bf16.mxu0 0
    %1177 = vmatpush1.bf16.msra.mxu0 0
    %1178 = vmatprep.mubr.bf16.mxu0 0
    %1179 = vmatmul.mubr.bf16.gmra.mrb[0].mxu0 %v1103
    %v1180 = vpop.f32.mrb[0].mxu0
    %v1181 = vadd.f32 %v1016, %v1180
    %v1182 = vpop.f32.mrb[0].mxu0
    %v1183 = vadd.f32 %v1018, %v1182
    %v1184 = vpop.f32.mrb[0].mxu0
    %v1185 = vpop.f32.mrb[0].mxu0
    %1186 = vdwg.mxu0
    %v1187 = vld [vmem:[%s16] sm:$0xff]
    %v1188 = vld [vmem:[%s16 + $0x8] sm:$0xff]
    %v1189 = vld [vmem:[%s16 + $0x10] sm:$0xff]
    %v1190 = vld [vmem:[%s16 + $0x18] sm:$0xff]
    %v1191 = vld [vmem:[%s16 + $0x20] sm:$0xff]
    %v1192 = vld [vmem:[%s16 + $0x28] sm:$0xff]
    %v1193 = vld [vmem:[%s16 + $0x30] sm:$0xff]
    %v1194 = vld [vmem:[%s16 + $0x38] sm:$0xff]
    %v1195 = vld [vmem:[%s16 + $0x40] sm:$0xff]
    %v1196 = vld [vmem:[%s16 + $0x48] sm:$0xff]
    %v1197 = vld [vmem:[%s16 + $0x50] sm:$0xff]
    %v1198 = vld [vmem:[%s16 + $0x58] sm:$0xff]
    %v1199 = vld [vmem:[%s16 + $0x60] sm:$0xff]
    %v1200 = vld [vmem:[%s16 + $0x68] sm:$0xff]
    %v1201 = vld [vmem:[%s16 + $0x70] sm:$0xff]
    %v1202 = vld [vmem:[%s16 + $0x78] sm:$0xff]
    %v1203 = vld [vmem:[%s16 + $0x80] sm:$0xff]
    %v1204 = vld [vmem:[%s16 + $0x88] sm:$0xff]
    %v1205 = vld [vmem:[%s16 + $0x90] sm:$0xff]
    %v1206 = vld [vmem:[%s16 + $0x98] sm:$0xff]
    %v1207 = vld [vmem:[%s16 + $0xa0] sm:$0xff]
    %v1208 = vld [vmem:[%s16 + $0xa8] sm:$0xff]
    %v1209 = vld [vmem:[%s16 + $0xb0] sm:$0xff]
    %v1210 = vld [vmem:[%s16 + $0xb8] sm:$0xff]
    %v1211 = vld [vmem:[%s16 + $0xc0] sm:$0xff]
    %v1212 = vld [vmem:[%s16 + $0xc8] sm:$0xff]
    %v1213 = vld [vmem:[%s16 + $0xd0] sm:$0xff]
    %v1214 = vld [vmem:[%s16 + $0xd8] sm:$0xff]
    %v1215 = vld [vmem:[%s16 + $0xe0] sm:$0xff]
    %v1216 = vld [vmem:[%s16 + $0xe8] sm:$0xff]
    %v1217 = vld [vmem:[%s16 + $0xf0] sm:$0xff]
    %v1218 = vld [vmem:[%s16 + $0xf8] sm:$0xff]
    %v1219 = vpack.c.bf16 %v821, %v821
    %v1252 = vunpack.c.l.b16 %v1187
    %v1253 = vunpack.c.h.b16 %v1187
    %v1254 = vunpack.c.l.b16 %v1188
    %v1255 = vunpack.c.h.b16 %v1188
    %v1256 = vunpack.c.l.b16 %v1189
    %v1257 = vunpack.c.h.b16 %v1189
    %v1258 = vunpack.c.l.b16 %v1190
    %v1259 = vunpack.c.h.b16 %v1190
    %v1260 = vunpack.c.l.b16 %v1191
    %v1261 = vunpack.c.h.b16 %v1191
    %v1262 = vunpack.c.l.b16 %v1192
    %v1263 = vunpack.c.h.b16 %v1192
    %v1264 = vunpack.c.l.b16 %v1193
    %v1265 = vunpack.c.h.b16 %v1193
    %v1266 = vunpack.c.l.b16 %v1194
    %v1267 = vunpack.c.h.b16 %v1194
    %v1268 = vunpack.c.l.b16 %v1195
    %v1269 = vunpack.c.h.b16 %v1195
    %v1270 = vunpack.c.l.b16 %v1196
    %v1271 = vunpack.c.h.b16 %v1196
    %v1272 = vunpack.c.l.b16 %v1197
    %v1273 = vunpack.c.h.b16 %v1197
    %v1274 = vunpack.c.l.b16 %v1198
    %v1275 = vunpack.c.h.b16 %v1198
    %v1276 = vunpack.c.l.b16 %v1199
    %v1277 = vunpack.c.h.b16 %v1199
    %v1278 = vunpack.c.l.b16 %v1200
    %v1279 = vunpack.c.h.b16 %v1200
    %v1280 = vunpack.c.l.b16 %v1201
    %v1281 = vunpack.c.h.b16 %v1201
    %v1282 = vunpack.c.l.b16 %v1202
    %v1283 = vunpack.c.h.b16 %v1202
    %v1284 = vunpack.c.l.b16 %v1203
    %v1285 = vunpack.c.h.b16 %v1203
    %v1286 = vunpack.c.l.b16 %v1204
    %v1287 = vunpack.c.h.b16 %v1204
    %v1288 = vunpack.c.l.b16 %v1205
    %v1289 = vunpack.c.h.b16 %v1205
    %v1290 = vunpack.c.l.b16 %v1206
    %v1291 = vunpack.c.h.b16 %v1206
    %v1292 = vunpack.c.l.b16 %v1207
    %v1293 = vunpack.c.h.b16 %v1207
    %v1294 = vunpack.c.l.b16 %v1208
    %v1295 = vunpack.c.h.b16 %v1208
    %v1296 = vunpack.c.l.b16 %v1209
    %v1297 = vunpack.c.h.b16 %v1209
    %v1298 = vunpack.c.l.b16 %v1210
    %v1299 = vunpack.c.h.b16 %v1210
    %v1300 = vunpack.c.l.b16 %v1211
    %v1301 = vunpack.c.h.b16 %v1211
    %v1302 = vunpack.c.l.b16 %v1212
    %v1303 = vunpack.c.h.b16 %v1212
    %v1304 = vunpack.c.l.b16 %v1213
    %v1305 = vunpack.c.h.b16 %v1213
    %v1306 = vunpack.c.l.b16 %v1214
    %v1307 = vunpack.c.h.b16 %v1214
    %v1308 = vunpack.c.l.b16 %v1215
    %v1309 = vunpack.c.h.b16 %v1215
    %v1310 = vunpack.c.l.b16 %v1216
    %v1311 = vunpack.c.h.b16 %v1216
    %v1312 = vunpack.c.l.b16 %v1217
    %v1313 = vunpack.c.h.b16 %v1217
    %v1314 = vunpack.c.l.b16 %v1218
    %v1315 = vunpack.c.h.b16 %v1218
    %v1316 = vpack.c.b16 %v1256, %v1252
    %v1317 = vpack.c.b16 %v1257, %v1253
    %v1318 = vpack.c.b16 %v1258, %v1254
    %v1319 = vpack.c.b16 %v1259, %v1255
    %v1320 = vpack.c.b16 %v1264, %v1260
    %v1321 = vpack.c.b16 %v1265, %v1261
    %v1322 = vpack.c.b16 %v1266, %v1262
    %v1323 = vpack.c.b16 %v1267, %v1263
    %v1324 = vpack.c.b16 %v1272, %v1268
    %v1325 = vpack.c.b16 %v1273, %v1269
    %v1326 = vpack.c.b16 %v1274, %v1270
    %v1327 = vpack.c.b16 %v1275, %v1271
    %v1328 = vpack.c.b16 %v1280, %v1276
    %v1329 = vpack.c.b16 %v1281, %v1277
    %v1330 = vpack.c.b16 %v1282, %v1278
    %v1331 = vpack.c.b16 %v1283, %v1279
    %v1332 = vpack.c.b16 %v1288, %v1284
    %v1333 = vpack.c.b16 %v1289, %v1285
    %v1334 = vpack.c.b16 %v1290, %v1286
    %v1335 = vpack.c.b16 %v1291, %v1287
    %v1336 = vpack.c.b16 %v1296, %v1292
    %v1337 = vpack.c.b16 %v1297, %v1293
    %v1338 = vpack.c.b16 %v1298, %v1294
    %v1339 = vpack.c.b16 %v1299, %v1295
    %v1340 = vpack.c.b16 %v1304, %v1300
    %v1341 = vpack.c.b16 %v1305, %v1301
    %v1342 = vpack.c.b16 %v1306, %v1302
    %v1343 = vpack.c.b16 %v1307, %v1303
    %v1344 = vpack.c.b16 %v1312, %v1308
    %v1345 = vpack.c.b16 %v1313, %v1309
    %v1346 = vpack.c.b16 %v1314, %v1310
    %v1347 = vpack.c.b16 %v1315, %v1311
    %1380 = vmatprep.subr.bf16.mxu0 %v1317
    %1381 = vmatpush1.bf16.msra.mxu0 %v1316
    %1382 = vmatprep.subr.bf16.mxu0 %v1321
    %1383 = vmatpush1.bf16.msra.mxu0 %v1320
    %1384 = vmatprep.subr.bf16.mxu0 %v1325
    %1385 = vmatpush1.bf16.msra.mxu0 %v1324
    %1386 = vmatprep.subr.bf16.mxu0 %v1329
    %1387 = vmatpush1.bf16.msra.mxu0 %v1328
    %1388 = vmatprep.subr.bf16.mxu0 %v1333
    %1389 = vmatpush1.bf16.msra.mxu0 %v1332
    %1390 = vmatprep.subr.bf16.mxu0 %v1337
    %1391 = vmatpush1.bf16.msra.mxu0 %v1336
    %1392 = vmatprep.subr.bf16.mxu0 %v1341
    %1393 = vmatpush1.bf16.msra.mxu0 %v1340
    %1394 = vmatprep.subr.bf16.mxu0 %v1345
    %1395 = vmatpush1.bf16.msra.mxu0 %v1344
    %1396 = vmatprep.subr.bf16.mxu0 0
    %1397 = vmatpush1.bf16.msra.mxu0 0
    %1398 = vmatprep.subr.bf16.mxu0 0
    %1399 = vmatpush1.bf16.msra.mxu0 0
    %1400 = vmatprep.subr.bf16.mxu0 0
    %1401 = vmatpush1.bf16.msra.mxu0 0
    %1402 = vmatprep.subr.bf16.mxu0 0
    %1403 = vmatpush1.bf16.msra.mxu0 0
    %1404 = vmatprep.subr.bf16.mxu0 0
    %1405 = vmatpush1.bf16.msra.mxu0 0
    %1406 = vmatprep.subr.bf16.mxu0 0
    %1407 = vmatpush1.bf16.msra.mxu0 0
    %1408 = vmatprep.subr.bf16.mxu0 0
    %1409 = vmatpush1.bf16.msra.mxu0 0
    %1410 = vmatprep.subr.bf16.mxu0 0
    %1411 = vmatpush1.bf16.msra.mxu0 0
    %1412 = vmatprep.mubr.bf16.mxu0 0
    %1413 = vmatmul.mubr.bf16.gmra.mrb[0].mxu0 %v1219
    %v1414 = vpop.f32.mrb[0].mxu0
    %v1415 = vadd.f32 0.0, %v1414
    %v1416 = vpop.f32.mrb[0].mxu0
    %v1417 = vadd.f32 0.0, %v1416
    %v1418 = vpop.f32.mrb[0].mxu0
    %v1419 = vpop.f32.mrb[0].mxu0
    %1420 = vdwg.mxu0
    %1421 = vmatprep.subr.bf16.mxu0 %v1319
    %1422 = vmatpush1.bf16.msra.mxu0 %v1318
    %1423 = vmatprep.subr.bf16.mxu0 %v1323
    %1424 = vmatpush1.bf16.msra.mxu0 %v1322
    %1425 = vmatprep.subr.bf16.mxu0 %v1327
    %1426 = vmatpush1.bf16.msra.mxu0 %v1326
    %1427 = vmatprep.subr.bf16.mxu0 %v1331
    %1428 = vmatpush1.bf16.msra.mxu0 %v1330
    %1429 = vmatprep.subr.bf16.mxu0 %v1335
    %1430 = vmatpush1.bf16.msra.mxu0 %v1334
    %1431 = vmatprep.subr.bf16.mxu0 %v1339
    %1432 = vmatpush1.bf16.msra.mxu0 %v1338
    %1433 = vmatprep.subr.bf16.mxu0 %v1343
    %1434 = vmatpush1.bf16.msra.mxu0 %v1342
    %1435 = vmatprep.subr.bf16.mxu0 %v1347
    %1436 = vmatpush1.bf16.msra.mxu0 %v1346
    %1437 = vmatprep.subr.bf16.mxu0 0
    %1438 = vmatpush1.bf16.msra.mxu0 0
    %1439 = vmatprep.subr.bf16.mxu0 0
    %1440 = vmatpush1.bf16.msra.mxu0 0
    %1441 = vmatprep.subr.bf16.mxu0 0
    %1442 = vmatpush1.bf16.msra.mxu0 0
    %1443 = vmatprep.subr.bf16.mxu0 0
    %1444 = vmatpush1.bf16.msra.mxu0 0
    %1445 = vmatprep.subr.bf16.mxu0 0
    %1446 = vmatpush1.bf16.msra.mxu0 0
    %1447 = vmatprep.subr.bf16.mxu0 0
    %1448 = vmatpush1.bf16.msra.mxu0 0
    %1449 = vmatprep.subr.bf16.mxu0 0
    %1450 = vmatpush1.bf16.msra.mxu0 0
    %1451 = vmatprep.subr.bf16.mxu0 0
    %1452 = vmatpush1.bf16.msra.mxu0 0
    %1453 = vmatprep.mubr.bf16.mxu0 0
    %1454 = vmatmul.mubr.bf16.gmra.mrb[0].mxu0 %v1219
    %v1455 = vpop.f32.mrb[0].mxu0
    %v1456 = vadd.f32 0.0, %v1455
    %v1457 = vpop.f32.mrb[0].mxu0
    %v1458 = vadd.f32 0.0, %v1457
    %v1459 = vpop.f32.mrb[0].mxu0
    %v1460 = vpop.f32.mrb[0].mxu0
    %1461 = vdwg.mxu0
    %v1462 = vadd.f32 %v1140, %v1415
    %v1463 = vadd.f32 %v1142, %v1417
    %v1464 = vadd.f32 %v1181, %v1456
    %v1465 = vadd.f32 %v1183, %v1458
    %v1466 = vld [vmem:[%s17] sm:$0xf]
    %v1468 = vlaneseq
    %v1469 = vshrl.u32 %v1468, 7
    %v1470 = vsub.s32 0, %v1469
    %v1471 = vrot.slane %v1466, %v1470
    %v1472 = vlaneseq
    %v1473 = vshrl.u32 %v1472, 7
    %v1474 = vsub.s32 1, %v1473
    %v1475 = vrot.slane %v1466, %v1474
    %v1476 = vlaneseq
    %v1477 = vshrl.u32 %v1476, 7
    %v1478 = vsub.s32 2, %v1477
    %v1479 = vrot.slane %v1466, %v1478
    %v1480 = vlaneseq
    %v1481 = vshrl.u32 %v1480, 7
    %v1482 = vsub.s32 3, %v1481
    %v1483 = vrot.slane %v1466, %v1482
    %v1488 = vadd.f32 %v1462, %v1471
    %v1489 = vadd.f32 %v1463, %v1475
    %v1490 = vadd.f32 %v1464, %v1479
    %v1491 = vadd.f32 %v1465, %v1483
    %v1492 = vmax.f32 %v1488, 0.0
    %v1493 = vmax.f32 %v1489, 0.0
    %v1494 = vmax.f32 %v1490, 0.0
    %v1495 = vmax.f32 %v1491, 0.0
    %v1496 = vld [vmem:[%s18] sm:$0xff]
    %v1497 = vld [vmem:[%s18 + $0x8] sm:$0xff]
    %v1498 = vld [vmem:[%s18 + $0x10] sm:$0xff]
    %v1499 = vld [vmem:[%s18 + $0x18] sm:$0xff]
    %v1500 = vld [vmem:[%s18 + $0x20] sm:$0xff]
    %v1501 = vld [vmem:[%s18 + $0x28] sm:$0xff]
    %v1502 = vld [vmem:[%s18 + $0x30] sm:$0xff]
    %v1503 = vld [vmem:[%s18 + $0x38] sm:$0xff]
    %v1504 = vld [vmem:[%s18 + $0x40] sm:$0xff]
    %v1505 = vld [vmem:[%s18 + $0x48] sm:$0xff]
    %v1506 = vld [vmem:[%s18 + $0x50] sm:$0xff]
    %v1507 = vld [vmem:[%s18 + $0x58] sm:$0xff]
    %v1508 = vld [vmem:[%s18 + $0x60] sm:$0xff]
    %v1509 = vld [vmem:[%s18 + $0x68] sm:$0xff]
    %v1510 = vld [vmem:[%s18 + $0x70] sm:$0xff]
    %v1511 = vld [vmem:[%s18 + $0x78] sm:$0xff]
    %v1512 = vld [vmem:[%s18 + $0x80] sm:$0xff]
    %v1513 = vld [vmem:[%s18 + $0x88] sm:$0xff]
    %v1514 = vld [vmem:[%s18 + $0x90] sm:$0xff]
    %v1515 = vld [vmem:[%s18 + $0x98] sm:$0xff]
    %v1516 = vld [vmem:[%s18 + $0xa0] sm:$0xff]
    %v1517 = vld [vmem:[%s18 + $0xa8] sm:$0xff]
    %v1518 = vld [vmem:[%s18 + $0xb0] sm:$0xff]
    %v1519 = vld [vmem:[%s18 + $0xb8] sm:$0xff]
    %v1520 = vld [vmem:[%s18 + $0xc0] sm:$0xff]
    %v1521 = vld [vmem:[%s18 + $0xc8] sm:$0xff]
    %v1522 = vld [vmem:[%s18 + $0xd0] sm:$0xff]
    %v1523 = vld [vmem:[%s18 + $0xd8] sm:$0xff]
    %v1524 = vld [vmem:[%s18 + $0xe0] sm:$0xff]
    %v1525 = vld [vmem:[%s18 + $0xe8] sm:$0xff]
    %v1526 = vld [vmem:[%s18 + $0xf0] sm:$0xff]
    %v1527 = vld [vmem:[%s18 + $0xf8] sm:$0xff]
    %v1528 = vld [vmem:[%s18 + $0x100] sm:$0xff]
    %v1529 = vld [vmem:[%s18 + $0x108] sm:$0xff]
    %v1530 = vld [vmem:[%s18 + $0x110] sm:$0xff]
    %v1531 = vld [vmem:[%s18 + $0x118] sm:$0xff]
    %v1532 = vld [vmem:[%s18 + $0x120] sm:$0xff]
    %v1533 = vld [vmem:[%s18 + $0x128] sm:$0xff]
    %v1534 = vld [vmem:[%s18 + $0x130] sm:$0xff]
    %v1535 = vld [vmem:[%s18 + $0x138] sm:$0xff]
    %v1536 = vld [vmem:[%s18 + $0x140] sm:$0xff]
    %v1537 = vld [vmem:[%s18 + $0x148] sm:$0xff]
    %v1538 = vld [vmem:[%s18 + $0x150] sm:$0xff]
    %v1539 = vld [vmem:[%s18 + $0x158] sm:$0xff]
    %v1540 = vld [vmem:[%s18 + $0x160] sm:$0xff]
    %v1541 = vld [vmem:[%s18 + $0x168] sm:$0xff]
    %v1542 = vld [vmem:[%s18 + $0x170] sm:$0xff]
    %v1543 = vld [vmem:[%s18 + $0x178] sm:$0xff]
    %v1544 = vld [vmem:[%s18 + $0x180] sm:$0xff]
    %v1545 = vld [vmem:[%s18 + $0x188] sm:$0xff]
    %v1546 = vld [vmem:[%s18 + $0x190] sm:$0xff]
    %v1547 = vld [vmem:[%s18 + $0x198] sm:$0xff]
    %v1548 = vld [vmem:[%s18 + $0x1a0] sm:$0xff]
    %v1549 = vld [vmem:[%s18 + $0x1a8] sm:$0xff]
    %v1550 = vld [vmem:[%s18 + $0x1b0] sm:$0xff]
    %v1551 = vld [vmem:[%s18 + $0x1b8] sm:$0xff]
    %v1552 = vld [vmem:[%s18 + $0x1c0] sm:$0xff]
    %v1553 = vld [vmem:[%s18 + $0x1c8] sm:$0xff]
    %v1554 = vld [vmem:[%s18 + $0x1d0] sm:$0xff]
    %v1555 = vld [vmem:[%s18 + $0x1d8] sm:$0xff]
    %v1556 = vld [vmem:[%s18 + $0x1e0] sm:$0xff]
    %v1557 = vld [vmem:[%s18 + $0x1e8] sm:$0xff]
    %v1558 = vld [vmem:[%s18 + $0x1f0] sm:$0xff]
    %v1559 = vld [vmem:[%s18 + $0x1f8] sm:$0xff]
    %v1560 = vld [vmem:[%s18 + $0x200] sm:$0xff]
    %v1561 = vld [vmem:[%s18 + $0x208] sm:$0xff]
    %v1562 = vld [vmem:[%s18 + $0x210] sm:$0xff]
    %v1563 = vld [vmem:[%s18 + $0x218] sm:$0xff]
    %v1564 = vld [vmem:[%s18 + $0x220] sm:$0xff]
    %v1565 = vld [vmem:[%s18 + $0x228] sm:$0xff]
    %v1566 = vld [vmem:[%s18 + $0x230] sm:$0xff]
    %v1567 = vld [vmem:[%s18 + $0x238] sm:$0xff]
    %v1568 = vld [vmem:[%s18 + $0x240] sm:$0xff]
    %v1569 = vld [vmem:[%s18 + $0x248] sm:$0xff]
    %v1570 = vld [vmem:[%s18 + $0x250] sm:$0xff]
    %v1571 = vld [vmem:[%s18 + $0x258] sm:$0xff]
    %v1572 = vld [vmem:[%s18 + $0x260] sm:$0xff]
    %v1573 = vld [vmem:[%s18 + $0x268] sm:$0xff]
    %v1574 = vld [vmem:[%s18 + $0x270] sm:$0xff]
    %v1575 = vld [vmem:[%s18 + $0x278] sm:$0xff]
    %v1576 = vld [vmem:[%s18 + $0x280] sm:$0xff]
    %v1577 = vld [vmem:[%s18 + $0x288] sm:$0xff]
    %v1578 = vld [vmem:[%s18 + $0x290] sm:$0xff]
    %v1579 = vld [vmem:[%s18 + $0x298] sm:$0xff]
    %v1580 = vld [vmem:[%s18 + $0x2a0] sm:$0xff]
    %v1581 = vld [vmem:[%s18 + $0x2a8] sm:$0xff]
    %v1582 = vld [vmem:[%s18 + $0x2b0] sm:$0xff]
    %v1583 = vld [vmem:[%s18 + $0x2b8] sm:$0xff]
    %v1584 = vld [vmem:[%s18 + $0x2c0] sm:$0xff]
    %v1585 = vld [vmem:[%s18 + $0x2c8] sm:$0xff]
    %v1586 = vld [vmem:[%s18 + $0x2d0] sm:$0xff]
    %v1587 = vld [vmem:[%s18 + $0x2d8] sm:$0xff]
    %v1588 = vld [vmem:[%s18 + $0x2e0] sm:$0xff]
    %v1589 = vld [vmem:[%s18 + $0x2e8] sm:$0xff]
    %v1590 = vld [vmem:[%s18 + $0x2f0] sm:$0xff]
    %v1591 = vld [vmem:[%s18 + $0x2f8] sm:$0xff]
    %v1592 = vld [vmem:[%s18 + $0x300] sm:$0xff]
    %v1593 = vld [vmem:[%s18 + $0x308] sm:$0xff]
    %v1594 = vld [vmem:[%s18 + $0x310] sm:$0xff]
    %v1595 = vld [vmem:[%s18 + $0x318] sm:$0xff]
    %v1596 = vld [vmem:[%s18 + $0x320] sm:$0xff]
    %v1597 = vld [vmem:[%s18 + $0x328] sm:$0xff]
    %v1598 = vld [vmem:[%s18 + $0x330] sm:$0xff]
    %v1599 = vld [vmem:[%s18 + $0x338] sm:$0xff]
    %v1600 = vld [vmem:[%s18 + $0x340] sm:$0xff]
    %v1601 = vld [vmem:[%s18 + $0x348] sm:$0xff]
    %v1602 = vld [vmem:[%s18 + $0x350] sm:$0xff]
    %v1603 = vld [vmem:[%s18 + $0x358] sm:$0xff]
    %v1604 = vld [vmem:[%s18 + $0x360] sm:$0xff]
    %v1605 = vld [vmem:[%s18 + $0x368] sm:$0xff]
    %v1606 = vld [vmem:[%s18 + $0x370] sm:$0xff]
    %v1607 = vld [vmem:[%s18 + $0x378] sm:$0xff]
    %v1608 = vld [vmem:[%s18 + $0x380] sm:$0xff]
    %v1609 = vld [vmem:[%s18 + $0x388] sm:$0xff]
    %v1610 = vld [vmem:[%s18 + $0x390] sm:$0xff]
    %v1611 = vld [vmem:[%s18 + $0x398] sm:$0xff]
    %v1612 = vld [vmem:[%s18 + $0x3a0] sm:$0xff]
    %v1613 = vld [vmem:[%s18 + $0x3a8] sm:$0xff]
    %v1614 = vld [vmem:[%s18 + $0x3b0] sm:$0xff]
    %v1615 = vld [vmem:[%s18 + $0x3b8] sm:$0xff]
    %v1616 = vld [vmem:[%s18 + $0x3c0] sm:$0xff]
    %v1617 = vld [vmem:[%s18 + $0x3c8] sm:$0xff]
    %v1618 = vld [vmem:[%s18 + $0x3d0] sm:$0xff]
    %v1619 = vld [vmem:[%s18 + $0x3d8] sm:$0xff]
    %v1620 = vld [vmem:[%s18 + $0x3e0] sm:$0xff]
    %v1621 = vld [vmem:[%s18 + $0x3e8] sm:$0xff]
    %v1622 = vld [vmem:[%s18 + $0x3f0] sm:$0xff]
    %v1623 = vld [vmem:[%s18 + $0x3f8] sm:$0xff]
    %v1624 = vpack.c.bf16 %v1492, %v1492
    %v1625 = vpack.c.bf16 %v1493, %v1493
    %v1626 = vpack.c.bf16 %v1494, %v1494
    %v1627 = vpack.c.bf16 %v1495, %v1495
    %v1628 = vld [vmem:[%s19] sm:$0xf]
    %v1630 = vlaneseq
    %v1631 = vshrl.u32 %v1630, 7
    %v1632 = vsub.s32 0, %v1631
    %v1633 = vrot.slane %v1628, %v1632
    %v1634 = vlaneseq
    %v1635 = vshrl.u32 %v1634, 7
    %v1636 = vsub.s32 1, %v1635
    %v1637 = vrot.slane %v1628, %v1636
    %v1638 = vlaneseq
    %v1639 = vshrl.u32 %v1638, 7
    %v1640 = vsub.s32 2, %v1639
    %v1641 = vrot.slane %v1628, %v1640
    %v1642 = vlaneseq
    %v1643 = vshrl.u32 %v1642, 7
    %v1644 = vsub.s32 3, %v1643
    %v1645 = vrot.slane %v1628, %v1644
    %v1778 = vunpack.c.l.b16 %v1496
    %v1779 = vunpack.c.h.b16 %v1496
    %v1780 = vunpack.c.l.b16 %v1497
    %v1781 = vunpack.c.h.b16 %v1497
    %v1782 = vunpack.c.l.b16 %v1498
    %v1783 = vunpack.c.h.b16 %v1498
    %v1784 = vunpack.c.l.b16 %v1499
    %v1785 = vunpack.c.h.b16 %v1499
    %v1786 = vunpack.c.l.b16 %v1500
    %v1787 = vunpack.c.h.b16 %v1500
    %v1788 = vunpack.c.l.b16 %v1501
    %v1789 = vunpack.c.h.b16 %v1501
    %v1790 = vunpack.c.l.b16 %v1502
    %v1791 = vunpack.c.h.b16 %v1502
    %v1792 = vunpack.c.l.b16 %v1503
    %v1793 = vunpack.c.h.b16 %v1503
    %v1794 = vunpack.c.l.b16 %v1504
    %v1795 = vunpack.c.h.b16 %v1504
    %v1796 = vunpack.c.l.b16 %v1505
    %v1797 = vunpack.c.h.b16 %v1505
    %v1798 = vunpack.c.l.b16 %v1506
    %v1799 = vunpack.c.h.b16 %v1506
    %v1800 = vunpack.c.l.b16 %v1507
    %v1801 = vunpack.c.h.b16 %v1507
    %v1802 = vunpack.c.l.b16 %v1508
    %v1803 = vunpack.c.h.b16 %v1508
    %v1804 = vunpack.c.l.b16 %v1509
    %v1805 = vunpack.c.h.b16 %v1509
    %v1806 = vunpack.c.l.b16 %v1510
    %v1807 = vunpack.c.h.b16 %v1510
    %v1808 = vunpack.c.l.b16 %v1511
    %v1809 = vunpack.c.h.b16 %v1511
    %v1810 = vunpack.c.l.b16 %v1512
    %v1811 = vunpack.c.h.b16 %v1512
    %v1812 = vunpack.c.l.b16 %v1513
    %v1813 = vunpack.c.h.b16 %v1513
    %v1814 = vunpack.c.l.b16 %v1514
    %v1815 = vunpack.c.h.b16 %v1514
    %v1816 = vunpack.c.l.b16 %v1515
    %v1817 = vunpack.c.h.b16 %v1515
    %v1818 = vunpack.c.l.b16 %v1516
    %v1819 = vunpack.c.h.b16 %v1516
    %v1820 = vunpack.c.l.b16 %v1517
    %v1821 = vunpack.c.h.b16 %v1517
    %v1822 = vunpack.c.l.b16 %v1518
    %v1823 = vunpack.c.h.b16 %v1518
    %v1824 = vunpack.c.l.b16 %v1519
    %v1825 = vunpack.c.h.b16 %v1519
    %v1826 = vunpack.c.l.b16 %v1520
    %v1827 = vunpack.c.h.b16 %v1520
    %v1828 = vunpack.c.l.b16 %v1521
    %v1829 = vunpack.c.h.b16 %v1521
    %v1830 = vunpack.c.l.b16 %v1522
    %v1831 = vunpack.c.h.b16 %v1522
    %v1832 = vunpack.c.l.b16 %v1523
    %v1833 = vunpack.c.h.b16 %v1523
    %v1834 = vunpack.c.l.b16 %v1524
    %v1835 = vunpack.c.h.b16 %v1524
    %v1836 = vunpack.c.l.b16 %v1525
    %v1837 = vunpack.c.h.b16 %v1525
    %v1838 = vunpack.c.l.b16 %v1526
    %v1839 = vunpack.c.h.b16 %v1526
    %v1840 = vunpack.c.l.b16 %v1527
    %v1841 = vunpack.c.h.b16 %v1527
    %v1842 = vunpack.c.l.b16 %v1528
    %v1843 = vunpack.c.h.b16 %v1528
    %v1844 = vunpack.c.l.b16 %v1529
    %v1845 = vunpack.c.h.b16 %v1529
    %v1846 = vunpack.c.l.b16 %v1530
    %v1847 = vunpack.c.h.b16 %v1530
    %v1848 = vunpack.c.l.b16 %v1531
    %v1849 = vunpack.c.h.b16 %v1531
    %v1850 = vunpack.c.l.b16 %v1532
    %v1851 = vunpack.c.h.b16 %v1532
    %v1852 = vunpack.c.l.b16 %v1533
    %v1853 = vunpack.c.h.b16 %v1533
    %v1854 = vunpack.c.l.b16 %v1534
    %v1855 = vunpack.c.h.b16 %v1534
    %v1856 = vunpack.c.l.b16 %v1535
    %v1857 = vunpack.c.h.b16 %v1535
    %v1858 = vunpack.c.l.b16 %v1536
    %v1859 = vunpack.c.h.b16 %v1536
    %v1860 = vunpack.c.l.b16 %v1537
    %v1861 = vunpack.c.h.b16 %v1537
    %v1862 = vunpack.c.l.b16 %v1538
    %v1863 = vunpack.c.h.b16 %v1538
    %v1864 = vunpack.c.l.b16 %v1539
    %v1865 = vunpack.c.h.b16 %v1539
    %v1866 = vunpack.c.l.b16 %v1540
    %v1867 = vunpack.c.h.b16 %v1540
    %v1868 = vunpack.c.l.b16 %v1541
    %v1869 = vunpack.c.h.b16 %v1541
    %v1870 = vunpack.c.l.b16 %v1542
    %v1871 = vunpack.c.h.b16 %v1542
    %v1872 = vunpack.c.l.b16 %v1543
    %v1873 = vunpack.c.h.b16 %v1543
    %v1874 = vunpack.c.l.b16 %v1544
    %v1875 = vunpack.c.h.b16 %v1544
    %v1876 = vunpack.c.l.b16 %v1545
    %v1877 = vunpack.c.h.b16 %v1545
    %v1878 = vunpack.c.l.b16 %v1546
    %v1879 = vunpack.c.h.b16 %v1546
    %v1880 = vunpack.c.l.b16 %v1547
    %v1881 = vunpack.c.h.b16 %v1547
    %v1882 = vunpack.c.l.b16 %v1548
    %v1883 = vunpack.c.h.b16 %v1548
    %v1884 = vunpack.c.l.b16 %v1549
    %v1885 = vunpack.c.h.b16 %v1549
    %v1886 = vunpack.c.l.b16 %v1550
    %v1887 = vunpack.c.h.b16 %v1550
    %v1888 = vunpack.c.l.b16 %v1551
    %v1889 = vunpack.c.h.b16 %v1551
    %v1890 = vunpack.c.l.b16 %v1552
    %v1891 = vunpack.c.h.b16 %v1552
    %v1892 = vunpack.c.l.b16 %v1553
    %v1893 = vunpack.c.h.b16 %v1553
    %v1894 = vunpack.c.l.b16 %v1554
    %v1895 = vunpack.c.h.b16 %v1554
    %v1896 = vunpack.c.l.b16 %v1555
    %v1897 = vunpack.c.h.b16 %v1555
    %v1898 = vunpack.c.l.b16 %v1556
    %v1899 = vunpack.c.h.b16 %v1556
    %v1900 = vunpack.c.l.b16 %v1557
    %v1901 = vunpack.c.h.b16 %v1557
    %v1902 = vunpack.c.l.b16 %v1558
    %v1903 = vunpack.c.h.b16 %v1558
    %v1904 = vunpack.c.l.b16 %v1559
    %v1905 = vunpack.c.h.b16 %v1559
    %v1906 = vunpack.c.l.b16 %v1560
    %v1907 = vunpack.c.h.b16 %v1560
    %v1908 = vunpack.c.l.b16 %v1561
    %v1909 = vunpack.c.h.b16 %v1561
    %v1910 = vunpack.c.l.b16 %v1562
    %v1911 = vunpack.c.h.b16 %v1562
    %v1912 = vunpack.c.l.b16 %v1563
    %v1913 = vunpack.c.h.b16 %v1563
    %v1914 = vunpack.c.l.b16 %v1564
    %v1915 = vunpack.c.h.b16 %v1564
    %v1916 = vunpack.c.l.b16 %v1565
    %v1917 = vunpack.c.h.b16 %v1565
    %v1918 = vunpack.c.l.b16 %v1566
    %v1919 = vunpack.c.h.b16 %v1566
    %v1920 = vunpack.c.l.b16 %v1567
    %v1921 = vunpack.c.h.b16 %v1567
    %v1922 = vunpack.c.l.b16 %v1568
    %v1923 = vunpack.c.h.b16 %v1568
    %v1924 = vunpack.c.l.b16 %v1569
    %v1925 = vunpack.c.h.b16 %v1569
    %v1926 = vunpack.c.l.b16 %v1570
    %v1927 = vunpack.c.h.b16 %v1570
    %v1928 = vunpack.c.l.b16 %v1571
    %v1929 = vunpack.c.h.b16 %v1571
    %v1930 = vunpack.c.l.b16 %v1572
    %v1931 = vunpack.c.h.b16 %v1572
    %v1932 = vunpack.c.l.b16 %v1573
    %v1933 = vunpack.c.h.b16 %v1573
    %v1934 = vunpack.c.l.b16 %v1574
    %v1935 = vunpack.c.h.b16 %v1574
    %v1936 = vunpack.c.l.b16 %v1575
    %v1937 = vunpack.c.h.b16 %v1575
    %v1938 = vunpack.c.l.b16 %v1576
    %v1939 = vunpack.c.h.b16 %v1576
    %v1940 = vunpack.c.l.b16 %v1577
    %v1941 = vunpack.c.h.b16 %v1577
    %v1942 = vunpack.c.l.b16 %v1578
    %v1943 = vunpack.c.h.b16 %v1578
    %v1944 = vunpack.c.l.b16 %v1579
    %v1945 = vunpack.c.h.b16 %v1579
    %v1946 = vunpack.c.l.b16 %v1580
    %v1947 = vunpack.c.h.b16 %v1580
    %v1948 = vunpack.c.l.b16 %v1581
    %v1949 = vunpack.c.h.b16 %v1581
    %v1950 = vunpack.c.l.b16 %v1582
    %v1951 = vunpack.c.h.b16 %v1582
    %v1952 = vunpack.c.l.b16 %v1583
    %v1953 = vunpack.c.h.b16 %v1583
    %v1954 = vunpack.c.l.b16 %v1584
    %v1955 = vunpack.c.h.b16 %v1584
    %v1956 = vunpack.c.l.b16 %v1585
    %v1957 = vunpack.c.h.b16 %v1585
    %v1958 = vunpack.c.l.b16 %v1586
    %v1959 = vunpack.c.h.b16 %v1586
    %v1960 = vunpack.c.l.b16 %v1587
    %v1961 = vunpack.c.h.b16 %v1587
    %v1962 = vunpack.c.l.b16 %v1588
    %v1963 = vunpack.c.h.b16 %v1588
    %v1964 = vunpack.c.l.b16 %v1589
    %v1965 = vunpack.c.h.b16 %v1589
    %v1966 = vunpack.c.l.b16 %v1590
    %v1967 = vunpack.c.h.b16 %v1590
    %v1968 = vunpack.c.l.b16 %v1591
    %v1969 = vunpack.c.h.b16 %v1591
    %v1970 = vunpack.c.l.b16 %v1592
    %v1971 = vunpack.c.h.b16 %v1592
    %v1972 = vunpack.c.l.b16 %v1593
    %v1973 = vunpack.c.h.b16 %v1593
    %v1974 = vunpack.c.l.b16 %v1594
    %v1975 = vunpack.c.h.b16 %v1594
    %v1976 = vunpack.c.l.b16 %v1595
    %v1977 = vunpack.c.h.b16 %v1595
    %v1978 = vunpack.c.l.b16 %v1596
    %v1979 = vunpack.c.h.b16 %v1596
    %v1980 = vunpack.c.l.b16 %v1597
    %v1981 = vunpack.c.h.b16 %v1597
    %v1982 = vunpack.c.l.b16 %v1598
    %v1983 = vunpack.c.h.b16 %v1598
    %v1984 = vunpack.c.l.b16 %v1599
    %v1985 = vunpack.c.h.b16 %v1599
    %v1986 = vunpack.c.l.b16 %v1600
    %v1987 = vunpack.c.h.b16 %v1600
    %v1988 = vunpack.c.l.b16 %v1601
    %v1989 = vunpack.c.h.b16 %v1601
    %v1990 = vunpack.c.l.b16 %v1602
    %v1991 = vunpack.c.h.b16 %v1602
    %v1992 = vunpack.c.l.b16 %v1603
    %v1993 = vunpack.c.h.b16 %v1603
    %v1994 = vunpack.c.l.b16 %v1604
    %v1995 = vunpack.c.h.b16 %v1604
    %v1996 = vunpack.c.l.b16 %v1605
    %v1997 = vunpack.c.h.b16 %v1605
    %v1998 = vunpack.c.l.b16 %v1606
    %v1999 = vunpack.c.h.b16 %v1606
    %v2000 = vunpack.c.l.b16 %v1607
    %v2001 = vunpack.c.h.b16 %v1607
    %v2002 = vunpack.c.l.b16 %v1608
    %v2003 = vunpack.c.h.b16 %v1608
    %v2004 = vunpack.c.l.b16 %v1609
    %v2005 = vunpack.c.h.b16 %v1609
    %v2006 = vunpack.c.l.b16 %v1610
    %v2007 = vunpack.c.h.b16 %v1610
    %v2008 = vunpack.c.l.b16 %v1611
    %v2009 = vunpack.c.h.b16 %v1611
    %v2010 = vunpack.c.l.b16 %v1612
    %v2011 = vunpack.c.h.b16 %v1612
    %v2012 = vunpack.c.l.b16 %v1613
    %v2013 = vunpack.c.h.b16 %v1613
    %v2014 = vunpack.c.l.b16 %v1614
    %v2015 = vunpack.c.h.b16 %v1614
    %v2016 = vunpack.c.l.b16 %v1615
    %v2017 = vunpack.c.h.b16 %v1615
    %v2018 = vunpack.c.l.b16 %v1616
    %v2019 = vunpack.c.h.b16 %v1616
    %v2020 = vunpack.c.l.b16 %v1617
    %v2021 = vunpack.c.h.b16 %v1617
    %v2022 = vunpack.c.l.b16 %v1618
    %v2023 = vunpack.c.h.b16 %v1618
    %v2024 = vunpack.c.l.b16 %v1619
    %v2025 = vunpack.c.h.b16 %v1619
    %v2026 = vunpack.c.l.b16 %v1620
    %v2027 = vunpack.c.h.b16 %v1620
    %v2028 = vunpack.c.l.b16 %v1621
    %v2029 = vunpack.c.h.b16 %v1621
    %v2030 = vunpack.c.l.b16 %v1622
    %v2031 = vunpack.c.h.b16 %v1622
    %v2032 = vunpack.c.l.b16 %v1623
    %v2033 = vunpack.c.h.b16 %v1623
    %v2034 = vpack.c.b16 %v1782, %v1778
    %v2035 = vpack.c.b16 %v1783, %v1779
    %v2036 = vpack.c.b16 %v1784, %v1780
    %v2037 = vpack.c.b16 %v1785, %v1781
    %v2038 = vpack.c.b16 %v1790, %v1786
    %v2039 = vpack.c.b16 %v1791, %v1787
    %v2040 = vpack.c.b16 %v1792, %v1788
    %v2041 = vpack.c.b16 %v1793, %v1789
    %v2042 = vpack.c.b16 %v1798, %v1794
    %v2043 = vpack.c.b16 %v1799, %v1795
    %v2044 = vpack.c.b16 %v1800, %v1796
    %v2045 = vpack.c.b16 %v1801, %v1797
    %v2046 = vpack.c.b16 %v1806, %v1802
    %v2047 = vpack.c.b16 %v1807, %v1803
    %v2048 = vpack.c.b16 %v1808, %v1804
    %v2049 = vpack.c.b16 %v1809, %v1805
    %v2050 = vpack.c.b16 %v1814, %v1810
    %v2051 = vpack.c.b16 %v1815, %v1811
    %v2052 = vpack.c.b16 %v1816, %v1812
    %v2053 = vpack.c.b16 %v1817, %v1813
    %v2054 = vpack.c.b16 %v1822, %v1818
    %v2055 = vpack.c.b16 %v1823, %v1819
    %v2056 = vpack.c.b16 %v1824, %v1820
    %v2057 = vpack.c.b16 %v1825, %v1821
    %v2058 = vpack.c.b16 %v1830, %v1826
    %v2059 = vpack.c.b16 %v1831, %v1827
    %v2060 = vpack.c.b16 %v1832, %v1828
    %v2061 = vpack.c.b16 %v1833, %v1829
    %v2062 = vpack.c.b16 %v1838, %v1834
    %v2063 = vpack.c.b16 %v1839, %v1835
    %v2064 = vpack.c.b16 %v1840, %v1836
    %v2065 = vpack.c.b16 %v1841, %v1837
    %v2066 = vpack.c.b16 %v1846, %v1842
    %v2067 = vpack.c.b16 %v1847, %v1843
    %v2068 = vpack.c.b16 %v1848, %v1844
    %v2069 = vpack.c.b16 %v1849, %v1845
    %v2070 = vpack.c.b16 %v1854, %v1850
    %v2071 = vpack.c.b16 %v1855, %v1851
    %v2072 = vpack.c.b16 %v1856, %v1852
    %v2073 = vpack.c.b16 %v1857, %v1853
    %v2074 = vpack.c.b16 %v1862, %v1858
    %v2075 = vpack.c.b16 %v1863, %v1859
    %v2076 = vpack.c.b16 %v1864, %v1860
    %v2077 = vpack.c.b16 %v1865, %v1861
    %v2078 = vpack.c.b16 %v1870, %v1866
    %v2079 = vpack.c.b16 %v1871, %v1867
    %v2080 = vpack.c.b16 %v1872, %v1868
    %v2081 = vpack.c.b16 %v1873, %v1869
    %v2082 = vpack.c.b16 %v1878, %v1874
    %v2083 = vpack.c.b16 %v1879, %v1875
    %v2084 = vpack.c.b16 %v1880, %v1876
    %v2085 = vpack.c.b16 %v1881, %v1877
    %v2086 = vpack.c.b16 %v1886, %v1882
    %v2087 = vpack.c.b16 %v1887, %v1883
    %v2088 = vpack.c.b16 %v1888, %v1884
    %v2089 = vpack.c.b16 %v1889, %v1885
    %v2090 = vpack.c.b16 %v1894, %v1890
    %v2091 = vpack.c.b16 %v1895, %v1891
    %v2092 = vpack.c.b16 %v1896, %v1892
    %v2093 = vpack.c.b16 %v1897, %v1893
    %v2094 = vpack.c.b16 %v1902, %v1898
    %v2095 = vpack.c.b16 %v1903, %v1899
    %v2096 = vpack.c.b16 %v1904, %v1900
    %v2097 = vpack.c.b16 %v1905, %v1901
    %v2098 = vpack.c.b16 %v1910, %v1906
    %v2099 = vpack.c.b16 %v1911, %v1907
    %v2100 = vpack.c.b16 %v1912, %v1908
    %v2101 = vpack.c.b16 %v1913, %v1909
    %v2102 = vpack.c.b16 %v1918, %v1914
    %v2103 = vpack.c.b16 %v1919, %v1915
    %v2104 = vpack.c.b16 %v1920, %v1916
    %v2105 = vpack.c.b16 %v1921, %v1917
    %v2106 = vpack.c.b16 %v1926, %v1922
    %v2107 = vpack.c.b16 %v1927, %v1923
    %v2108 = vpack.c.b16 %v1928, %v1924
    %v2109 = vpack.c.b16 %v1929, %v1925
    %v2110 = vpack.c.b16 %v1934, %v1930
    %v2111 = vpack.c.b16 %v1935, %v1931
    %v2112 = vpack.c.b16 %v1936, %v1932
    %v2113 = vpack.c.b16 %v1937, %v1933
    %v2114 = vpack.c.b16 %v1942, %v1938
    %v2115 = vpack.c.b16 %v1943, %v1939
    %v2116 = vpack.c.b16 %v1944, %v1940
    %v2117 = vpack.c.b16 %v1945, %v1941
    %v2118 = vpack.c.b16 %v1950, %v1946
    %v2119 = vpack.c.b16 %v1951, %v1947
    %v2120 = vpack.c.b16 %v1952, %v1948
    %v2121 = vpack.c.b16 %v1953, %v1949
    %v2122 = vpack.c.b16 %v1958, %v1954
    %v2123 = vpack.c.b16 %v1959, %v1955
    %v2124 = vpack.c.b16 %v1960, %v1956
    %v2125 = vpack.c.b16 %v1961, %v1957
    %v2126 = vpack.c.b16 %v1966, %v1962
    %v2127 = vpack.c.b16 %v1967, %v1963
    %v2128 = vpack.c.b16 %v1968, %v1964
    %v2129 = vpack.c.b16 %v1969, %v1965
    %v2130 = vpack.c.b16 %v1974, %v1970
    %v2131 = vpack.c.b16 %v1975, %v1971
    %v2132 = vpack.c.b16 %v1976, %v1972
    %v2133 = vpack.c.b16 %v1977, %v1973
    %v2134 = vpack.c.b16 %v1982, %v1978
    %v2135 = vpack.c.b16 %v1983, %v1979
    %v2136 = vpack.c.b16 %v1984, %v1980
    %v2137 = vpack.c.b16 %v1985, %v1981
    %v2138 = vpack.c.b16 %v1990, %v1986
    %v2139 = vpack.c.b16 %v1991, %v1987
    %v2140 = vpack.c.b16 %v1992, %v1988
    %v2141 = vpack.c.b16 %v1993, %v1989
    %v2142 = vpack.c.b16 %v1998, %v1994
    %v2143 = vpack.c.b16 %v1999, %v1995
    %v2144 = vpack.c.b16 %v2000, %v1996
    %v2145 = vpack.c.b16 %v2001, %v1997
    %v2146 = vpack.c.b16 %v2006, %v2002
    %v2147 = vpack.c.b16 %v2007, %v2003
    %v2148 = vpack.c.b16 %v2008, %v2004
    %v2149 = vpack.c.b16 %v2009, %v2005
    %v2150 = vpack.c.b16 %v2014, %v2010
    %v2151 = vpack.c.b16 %v2015, %v2011
    %v2152 = vpack.c.b16 %v2016, %v2012
    %v2153 = vpack.c.b16 %v2017, %v2013
    %v2154 = vpack.c.b16 %v2022, %v2018
    %v2155 = vpack.c.b16 %v2023, %v2019
    %v2156 = vpack.c.b16 %v2024, %v2020
    %v2157 = vpack.c.b16 %v2025, %v2021
    %v2158 = vpack.c.b16 %v2030, %v2026
    %v2159 = vpack.c.b16 %v2031, %v2027
    %v2160 = vpack.c.b16 %v2032, %v2028
    %v2161 = vpack.c.b16 %v2033, %v2029
    %2290 = vmatprep.subr.bf16.mxu0 %v2035
    %2291 = vmatpush1.bf16.msra.mxu0 %v2034
    %2292 = vmatprep.subr.bf16.mxu0 %v2039
    %2293 = vmatpush1.bf16.msra.mxu0 %v2038
    %2294 = vmatprep.subr.bf16.mxu0 %v2043
    %2295 = vmatpush1.bf16.msra.mxu0 %v2042
    %2296 = vmatprep.subr.bf16.mxu0 %v2047
    %2297 = vmatpush1.bf16.msra.mxu0 %v2046
    %2298 = vmatprep.subr.bf16.mxu0 %v2051
    %2299 = vmatpush1.bf16.msra.mxu0 %v2050
    %2300 = vmatprep.subr.bf16.mxu0 %v2055
    %2301 = vmatpush1.bf16.msra.mxu0 %v2054
    %2302 = vmatprep.subr.bf16.mxu0 %v2059
    %2303 = vmatpush1.bf16.msra.mxu0 %v2058
    %2304 = vmatprep.subr.bf16.mxu0 %v2063
    %2305 = vmatpush1.bf16.msra.mxu0 %v2062
    %2306 = vmatprep.subr.bf16.mxu0 %v2067
    %2307 = vmatpush1.bf16.msra.mxu0 %v2066
    %2308 = vmatprep.subr.bf16.mxu0 %v2071
    %2309 = vmatpush1.bf16.msra.mxu0 %v2070
    %2310 = vmatprep.subr.bf16.mxu0 %v2075
    %2311 = vmatpush1.bf16.msra.mxu0 %v2074
    %2312 = vmatprep.subr.bf16.mxu0 %v2079
    %2313 = vmatpush1.bf16.msra.mxu0 %v2078
    %2314 = vmatprep.subr.bf16.mxu0 %v2083
    %2315 = vmatpush1.bf16.msra.mxu0 %v2082
    %2316 = vmatprep.subr.bf16.mxu0 %v2087
    %2317 = vmatpush1.bf16.msra.mxu0 %v2086
    %2318 = vmatprep.subr.bf16.mxu0 %v2091
    %2319 = vmatpush1.bf16.msra.mxu0 %v2090
    %2320 = vmatprep.subr.bf16.mxu0 %v2095
    %2321 = vmatpush1.bf16.msra.mxu0 %v2094
    %2322 = vmatprep.mubr.bf16.mxu0 %v1625
    %2323 = vmatmul.mubr.bf16.gmra.mrb[0].mxu0 %v1624
    %v2324 = vpop.f32.mrb[0].mxu0
    %v2325 = vadd.f32 %v1633, %v2324
    %v2326 = vpop.f32.mrb[0].mxu0
    %v2327 = vadd.f32 %v1637, %v2326
    %v2328 = vpop.f32.mrb[0].mxu0
    %v2329 = vpop.f32.mrb[0].mxu0
    %2330 = vdwg.mxu0
    %2331 = vmatprep.subr.bf16.mxu0 %v2099
    %2332 = vmatpush1.bf16.msra.mxu0 %v2098
    %2333 = vmatprep.subr.bf16.mxu0 %v2103
    %2334 = vmatpush1.bf16.msra.mxu0 %v2102
    %2335 = vmatprep.subr.bf16.mxu0 %v2107
    %2336 = vmatpush1.bf16.msra.mxu0 %v2106
    %2337 = vmatprep.subr.bf16.mxu0 %v2111
    %2338 = vmatpush1.bf16.msra.mxu0 %v2110
    %2339 = vmatprep.subr.bf16.mxu0 %v2115
    %2340 = vmatpush1.bf16.msra.mxu0 %v2114
    %2341 = vmatprep.subr.bf16.mxu0 %v2119
    %2342 = vmatpush1.bf16.msra.mxu0 %v2118
    %2343 = vmatprep.subr.bf16.mxu0 %v2123
    %2344 = vmatpush1.bf16.msra.mxu0 %v2122
    %2345 = vmatprep.subr.bf16.mxu0 %v2127
    %2346 = vmatpush1.bf16.msra.mxu0 %v2126
    %2347 = vmatprep.subr.bf16.mxu0 %v2131
    %2348 = vmatpush1.bf16.msra.mxu0 %v2130
    %2349 = vmatprep.subr.bf16.mxu0 %v2135
    %2350 = vmatpush1.bf16.msra.mxu0 %v2134
    %2351 = vmatprep.subr.bf16.mxu0 %v2139
    %2352 = vmatpush1.bf16.msra.mxu0 %v2138
    %2353 = vmatprep.subr.bf16.mxu0 %v2143
    %2354 = vmatpush1.bf16.msra.mxu0 %v2142
    %2355 = vmatprep.subr.bf16.mxu0 %v2147
    %2356 = vmatpush1.bf16.msra.mxu0 %v2146
    %2357 = vmatprep.subr.bf16.mxu0 %v2151
    %2358 = vmatpush1.bf16.msra.mxu0 %v2150
    %2359 = vmatprep.subr.bf16.mxu0 %v2155
    %2360 = vmatpush1.bf16.msra.mxu0 %v2154
    %2361 = vmatprep.subr.bf16.mxu0 %v2159
    %2362 = vmatpush1.bf16.msra.mxu0 %v2158
    %2363 = vmatprep.mubr.bf16.mxu0 %v1627
    %2364 = vmatmul.mubr.bf16.gmra.mrb[0].mxu0 %v1626
    %v2365 = vpop.f32.mrb[0].mxu0
    %v2366 = vadd.f32 %v2325, %v2365
    %v2367 = vpop.f32.mrb[0].mxu0
    %v2368 = vadd.f32 %v2327, %v2367
    %v2369 = vpop.f32.mrb[0].mxu0
    %v2370 = vpop.f32.mrb[0].mxu0
    %2371 = vdwg.mxu0
    %2372 = vmatprep.subr.bf16.mxu0 %v2037
    %2373 = vmatpush1.bf16.msra.mxu0 %v2036
    %2374 = vmatprep.subr.bf16.mxu0 %v2041
    %2375 = vmatpush1.bf16.msra.mxu0 %v2040
    %2376 = vmatprep.subr.bf16.mxu0 %v2045
    %2377 = vmatpush1.bf16.msra.mxu0 %v2044
    %2378 = vmatprep.subr.bf16.mxu0 %v2049
    %2379 = vmatpush1.bf16.msra.mxu0 %v2048
    %2380 = vmatprep.subr.bf16.mxu0 %v2053
    %2381 = vmatpush1.bf16.msra.mxu0 %v2052
    %2382 = vmatprep.subr.bf16.mxu0 %v2057
    %2383 = vmatpush1.bf16.msra.mxu0 %v2056
    %2384 = vmatprep.subr.bf16.mxu0 %v2061
    %2385 = vmatpush1.bf16.msra.mxu0 %v2060
    %2386 = vmatprep.subr.bf16.mxu0 %v2065
    %2387 = vmatpush1.bf16.msra.mxu0 %v2064
    %2388 = vmatprep.subr.bf16.mxu0 %v2069
    %2389 = vmatpush1.bf16.msra.mxu0 %v2068
    %2390 = vmatprep.subr.bf16.mxu0 %v2073
    %2391 = vmatpush1.bf16.msra.mxu0 %v2072
    %2392 = vmatprep.subr.bf16.mxu0 %v2077
    %2393 = vmatpush1.bf16.msra.mxu0 %v2076
    %2394 = vmatprep.subr.bf16.mxu0 %v2081
    %2395 = vmatpush1.bf16.msra.mxu0 %v2080
    %2396 = vmatprep.subr.bf16.mxu0 %v2085
    %2397 = vmatpush1.bf16.msra.mxu0 %v2084
    %2398 = vmatprep.subr.bf16.mxu0 %v2089
    %2399 = vmatpush1.bf16.msra.mxu0 %v2088
    %2400 = vmatprep.subr.bf16.mxu0 %v2093
    %2401 = vmatpush1.bf16.msra.mxu0 %v2092
    %2402 = vmatprep.subr.bf16.mxu0 %v2097
    %2403 = vmatpush1.bf16.msra.mxu0 %v2096
    %2404 = vmatprep.mubr.bf16.mxu0 %v1625
    %2405 = vmatmul.mubr.bf16.gmra.mrb[0].mxu0 %v1624
    %v2406 = vpop.f32.mrb[0].mxu0
    %v2407 = vadd.f32 %v1641, %v2406
    %v2408 = vpop.f32.mrb[0].mxu0
    %v2409 = vadd.f32 %v1645, %v2408
    %v2410 = vpop.f32.mrb[0].mxu0
    %v2411 = vpop.f32.mrb[0].mxu0
    %2412 = vdwg.mxu0
    %2413 = vmatprep.subr.bf16.mxu0 %v2101
    %2414 = vmatpush1.bf16.msra.mxu0 %v2100
    %2415 = vmatprep.subr.bf16.mxu0 %v2105
    %2416 = vmatpush1.bf16.msra.mxu0 %v2104
    %2417 = vmatprep.subr.bf16.mxu0 %v2109
    %2418 = vmatpush1.bf16.msra.mxu0 %v2108
    %2419 = vmatprep.subr.bf16.mxu0 %v2113
    %2420 = vmatpush1.bf16.msra.mxu0 %v2112
    %2421 = vmatprep.subr.bf16.mxu0 %v2117
    %2422 = vmatpush1.bf16.msra.mxu0 %v2116
    %2423 = vmatprep.subr.bf16.mxu0 %v2121
    %2424 = vmatpush1.bf16.msra.mxu0 %v2120
    %2425 = vmatprep.subr.bf16.mxu0 %v2125
    %2426 = vmatpush1.bf16.msra.mxu0 %v2124
    %2427 = vmatprep.subr.bf16.mxu0 %v2129
    %2428 = vmatpush1.bf16.msra.mxu0 %v2128
    %2429 = vmatprep.subr.bf16.mxu0 %v2133
    %2430 = vmatpush1.bf16.msra.mxu0 %v2132
    %2431 = vmatprep.subr.bf16.mxu0 %v2137
    %2432 = vmatpush1.bf16.msra.mxu0 %v2136
    %2433 = vmatprep.subr.bf16.mxu0 %v2141
    %2434 = vmatpush1.bf16.msra.mxu0 %v2140
    %2435 = vmatprep.subr.bf16.mxu0 %v2145
    %2436 = vmatpush1.bf16.msra.mxu0 %v2144
    %2437 = vmatprep.subr.bf16.mxu0 %v2149
    %2438 = vmatpush1.bf16.msra.mxu0 %v2148
    %2439 = vmatprep.subr.bf16.mxu0 %v2153
    %2440 = vmatpush1.bf16.msra.mxu0 %v2152
    %2441 = vmatprep.subr.bf16.mxu0 %v2157
    %2442 = vmatpush1.bf16.msra.mxu0 %v2156
    %2443 = vmatprep.subr.bf16.mxu0 %v2161
    %2444 = vmatpush1.bf16.msra.mxu0 %v2160
    %2445 = vmatprep.mubr.bf16.mxu0 %v1627
    %2446 = vmatmul.mubr.bf16.gmra.mrb[0].mxu0 %v1626
    %v2447 = vpop.f32.mrb[0].mxu0
    %v2448 = vadd.f32 %v2407, %v2447
    %v2449 = vpop.f32.mrb[0].mxu0
    %v2450 = vadd.f32 %v2409, %v2449
    %v2451 = vpop.f32.mrb[0].mxu0
    %v2452 = vpop.f32.mrb[0].mxu0
    %2453 = vdwg.mxu0
    %vm2454 = vcmask 1041408
    %v2455 = vsel %vm2454, %v2366, 0.0
    %v2456 = vsel %vm2454, %v2368, 0.0
    %v2457 = vadd.f32 %v2455, %v2456
    %v2458 = vsel %vm2454, %v2448, 0.0
    %v2459 = vadd.f32 %v2457, %v2458
    %v2460 = vsel %vm2454, %v2450, 0.0
    %v2461 = vadd.f32 %v2459, %v2460
    %2462 = vadd.xlane.f32.xlu0 %v2461
    %v2463 = vpop.xlane.xlu0 %2462
    %v2464 = vrcp.pop 512.0
    %v2465 = vmul.f32 %v2463, %v2464
    %v2466 = vsub.f32 %v2366, %v2465
    %v2467 = vsub.f32 %v2368, %v2465
    %v2468 = vsub.f32 %v2448, %v2465
    %v2469 = vsub.f32 %v2450, %v2465
    %v2470 = vmul.f32 %v2466, %v2466
    %v2471 = vmul.f32 %v2467, %v2467
    %v2472 = vmul.f32 %v2468, %v2468
    %v2473 = vmul.f32 %v2469, %v2469
    %v2474 = vsel %vm2454, %v2470, 0.0
    %v2475 = vsel %vm2454, %v2471, 0.0
    %v2476 = vadd.f32 %v2474, %v2475
    %v2477 = vsel %vm2454, %v2472, 0.0
    %v2478 = vadd.f32 %v2476, %v2477
    %v2479 = vsel %vm2454, %v2473, 0.0
    %v2480 = vadd.f32 %v2478, %v2479
    %2481 = vadd.xlane.f32.xlu0 %v2480
    %v2482 = vpop.xlane.xlu0 %2481
    %v2483 = vmul.f32 %v2482, %v2464
    %v2484 = vadd.f32 %v2483, 1e-05
    %v2485 = vrsqrt.pop %v2484
    %v2486 = vmul.f32 %v2466, %v2485
    %v2487 = vmul.f32 %v2467, %v2485
    %v2488 = vmul.f32 %v2468, %v2485
    %v2489 = vmul.f32 %v2469, %v2485
    %v2490 = vld [vmem:[#allocation5] sm:$0xf]
    %v2491 = vld [vmem:[#allocation5 + $0x4] sm:$0xf]
    %v2492 = vld [vmem:[#allocation5 + $0x8] sm:$0xf]
    %v2493 = vld [vmem:[#allocation5 + $0xc] sm:$0xf]
    %v2494 = vld [vmem:[#allocation5 + $0x10] sm:$0xf]
    %v2495 = vld [vmem:[#allocation5 + $0x14] sm:$0xf]
    %v2496 = vld [vmem:[#allocation5 + $0x18] sm:$0xf]
    %v2497 = vld [vmem:[#allocation5 + $0x1c] sm:$0xf]
    %v2498 = vld [vmem:[#allocation5 + $0x20] sm:$0xf]
    %v2499 = vld [vmem:[#allocation5 + $0x24] sm:$0xf]
    %v2500 = vld [vmem:[#allocation5 + $0x28] sm:$0xf]
    %v2501 = vld [vmem:[#allocation5 + $0x2c] sm:$0xf]
    %v2502 = vld [vmem:[#allocation5 + $0x30] sm:$0xf]
    %v2503 = vld [vmem:[#allocation5 + $0x34] sm:$0xf]
    %v2504 = vld [vmem:[#allocation5 + $0x38] sm:$0xf]
    %v2505 = vld [vmem:[#allocation5 + $0x3c] sm:$0xf]
    %v2506 = vld [vmem:[#allocation5 + $0x40] sm:$0xf]
    %v2507 = vld [vmem:[#allocation5 + $0x44] sm:$0xf]
    %v2508 = vld [vmem:[#allocation5 + $0x48] sm:$0xf]
    %v2509 = vld [vmem:[#allocation5 + $0x4c] sm:$0xf]
    %v2510 = vld [vmem:[#allocation5 + $0x50] sm:$0xf]
    %v2511 = vld [vmem:[#allocation5 + $0x54] sm:$0xf]
    %v2512 = vld [vmem:[#allocation5 + $0x58] sm:$0xf]
    %v2513 = vld [vmem:[#allocation5 + $0x5c] sm:$0xf]
    %v2514 = vld [vmem:[#allocation5 + $0x60] sm:$0xf]
    %v2515 = vld [vmem:[#allocation5 + $0x64] sm:$0xf]
    %v2516 = vld [vmem:[#allocation5 + $0x68] sm:$0xf]
    %v2517 = vld [vmem:[#allocation5 + $0x6c] sm:$0xf]
    %v2518 = vld [vmem:[#allocation5 + $0x70] sm:$0xf]
    %v2519 = vld [vmem:[#allocation5 + $0x74] sm:$0xf]
    %v2520 = vld [vmem:[#allocation5 + $0x78] sm:$0xf]
    %v2521 = vld [vmem:[#allocation5 + $0x7c] sm:$0xf]
    %v2522 = vld [vmem:[#allocation5 + $0x80] sm:$0xf]
    %v2523 = vld [vmem:[#allocation5 + $0x84] sm:$0xf]
    %v2524 = vld [vmem:[#allocation5 + $0x88] sm:$0xf]
    %v2525 = vld [vmem:[#allocation5 + $0x8c] sm:$0xf]
    %v2526 = vld [vmem:[#allocation5 + $0x90] sm:$0xf]
    %v2527 = vld [vmem:[#allocation5 + $0x94] sm:$0xf]
    %v2528 = vld [vmem:[#allocation5 + $0x98] sm:$0xf]
    %v2529 = vld [vmem:[#allocation5 + $0x9c] sm:$0xf]
    %v2530 = vld [vmem:[#allocation5 + $0xa0] sm:$0xf]
    %v2531 = vld [vmem:[#allocation5 + $0xa4] sm:$0xf]
    %v2532 = vld [vmem:[#allocation5 + $0xa8] sm:$0xf]
    %v2533 = vld [vmem:[#allocation5 + $0xac] sm:$0xf]
    %v2534 = vld [vmem:[#allocation5 + $0xb0] sm:$0xf]
    %v2535 = vld [vmem:[#allocation5 + $0xb4] sm:$0xf]
    %v2536 = vld [vmem:[#allocation5 + $0xb8] sm:$0xf]
    %v2537 = vld [vmem:[#allocation5 + $0xbc] sm:$0xf]
    %v2538 = vld [vmem:[#allocation5 + $0xc0] sm:$0xf]
    %v2539 = vld [vmem:[#allocation5 + $0xc4] sm:$0xf]
    %v2540 = vld [vmem:[#allocation5 + $0xc8] sm:$0xf]
    %v2541 = vld [vmem:[#allocation5 + $0xcc] sm:$0xf]
    %v2542 = vld [vmem:[#allocation5 + $0xd0] sm:$0xf]
    %v2543 = vld [vmem:[#allocation5 + $0xd4] sm:$0xf]
    %v2544 = vld [vmem:[#allocation5 + $0xd8] sm:$0xf]
    %v2545 = vld [vmem:[#allocation5 + $0xdc] sm:$0xf]
    %v2546 = vld [vmem:[#allocation5 + $0xe0] sm:$0xf]
    %v2547 = vld [vmem:[#allocation5 + $0xe4] sm:$0xf]
    %v2548 = vld [vmem:[#allocation5 + $0xe8] sm:$0xf]
    %v2549 = vld [vmem:[#allocation5 + $0xec] sm:$0xf]
    %v2550 = vld [vmem:[#allocation5 + $0xf0] sm:$0xf]
    %v2551 = vld [vmem:[#allocation5 + $0xf4] sm:$0xf]
    %v2552 = vld [vmem:[#allocation5 + $0xf8] sm:$0xf]
    %v2553 = vld [vmem:[#allocation5 + $0xfc] sm:$0xf]
    %v2554 = vpack.c.bf16 %v2486, %v2486
    %v2555 = vpack.c.bf16 %v2487, %v2487
    %v2556 = vpack.c.bf16 %v2488, %v2488
    %v2557 = vpack.c.bf16 %v2489, %v2489
    %v2558 = vld [vmem:[%s21] sm:$0x1]
    %v2560 = vlaneseq
    %v2561 = vshrl.u32 %v2560, 7
    %v2562 = vsub.s32 0, %v2561
    %v2563 = vrot.slane %v2558, %v2562
    %v2629 = vunpack.c.l.b16 %v2490
    %v2630 = vunpack.c.l.b16 %v2491
    %v2631 = vunpack.c.l.b16 %v2492
    %v2632 = vunpack.c.l.b16 %v2493
    %v2633 = vunpack.c.l.b16 %v2494
    %v2634 = vunpack.c.l.b16 %v2495
    %v2635 = vunpack.c.l.b16 %v2496
    %v2636 = vunpack.c.l.b16 %v2497
    %v2637 = vunpack.c.l.b16 %v2498
    %v2638 = vunpack.c.l.b16 %v2499
    %v2639 = vunpack.c.l.b16 %v2500
    %v2640 = vunpack.c.l.b16 %v2501
    %v2641 = vunpack.c.l.b16 %v2502
    %v2642 = vunpack.c.l.b16 %v2503
    %v2643 = vunpack.c.l.b16 %v2504
    %v2644 = vunpack.c.l.b16 %v2505
    %v2645 = vunpack.c.l.b16 %v2506
    %v2646 = vunpack.c.l.b16 %v2507
    %v2647 = vunpack.c.l.b16 %v2508
    %v2648 = vunpack.c.l.b16 %v2509
    %v2649 = vunpack.c.l.b16 %v2510
    %v2650 = vunpack.c.l.b16 %v2511
    %v2651 = vunpack.c.l.b16 %v2512
    %v2652 = vunpack.c.l.b16 %v2513
    %v2653 = vunpack.c.l.b16 %v2514
    %v2654 = vunpack.c.l.b16 %v2515
    %v2655 = vunpack.c.l.b16 %v2516
    %v2656 = vunpack.c.l.b16 %v2517
    %v2657 = vunpack.c.l.b16 %v2518
    %v2658 = vunpack.c.l.b16 %v2519
    %v2659 = vunpack.c.l.b16 %v2520
    %v2660 = vunpack.c.l.b16 %v2521
    %v2661 = vunpack.c.l.b16 %v2522
    %v2662 = vunpack.c.l.b16 %v2523
    %v2663 = vunpack.c.l.b16 %v2524
    %v2664 = vunpack.c.l.b16 %v2525
    %v2665 = vunpack.c.l.b16 %v2526
    %v2666 = vunpack.c.l.b16 %v2527
    %v2667 = vunpack.c.l.b16 %v2528
    %v2668 = vunpack.c.l.b16 %v2529
    %v2669 = vunpack.c.l.b16 %v2530
    %v2670 = vunpack.c.l.b16 %v2531
    %v2671 = vunpack.c.l.b16 %v2532
    %v2672 = vunpack.c.l.b16 %v2533
    %v2673 = vunpack.c.l.b16 %v2534
    %v2674 = vunpack.c.l.b16 %v2535
    %v2675 = vunpack.c.l.b16 %v2536
    %v2676 = vunpack.c.l.b16 %v2537
    %v2677 = vunpack.c.l.b16 %v2538
    %v2678 = vunpack.c.l.b16 %v2539
    %v2679 = vunpack.c.l.b16 %v2540
    %v2680 = vunpack.c.l.b16 %v2541
    %v2681 = vunpack.c.l.b16 %v2542
    %v2682 = vunpack.c.l.b16 %v2543
    %v2683 = vunpack.c.l.b16 %v2544
    %v2684 = vunpack.c.l.b16 %v2545
    %v2685 = vunpack.c.l.b16 %v2546
    %v2686 = vunpack.c.l.b16 %v2547
    %v2687 = vunpack.c.l.b16 %v2548
    %v2688 = vunpack.c.l.b16 %v2549
    %v2689 = vunpack.c.l.b16 %v2550
    %v2690 = vunpack.c.l.b16 %v2551
    %v2691 = vunpack.c.l.b16 %v2552
    %v2692 = vunpack.c.l.b16 %v2553
    %v2693 = vpack.c.b16 %v2630, %v2629
    %v2694 = vpack.c.b16 %v2632, %v2631
    %v2695 = vpack.c.b16 %v2634, %v2633
    %v2696 = vpack.c.b16 %v2636, %v2635
    %v2697 = vpack.c.b16 %v2638, %v2637
    %v2698 = vpack.c.b16 %v2640, %v2639
    %v2699 = vpack.c.b16 %v2642, %v2641
    %v2700 = vpack.c.b16 %v2644, %v2643
    %v2701 = vpack.c.b16 %v2646, %v2645
    %v2702 = vpack.c.b16 %v2648, %v2647
    %v2703 = vpack.c.b16 %v2650, %v2649
    %v2704 = vpack.c.b16 %v2652, %v2651
    %v2705 = vpack.c.b16 %v2654, %v2653
    %v2706 = vpack.c.b16 %v2656, %v2655
    %v2707 = vpack.c.b16 %v2658, %v2657
    %v2708 = vpack.c.b16 %v2660, %v2659
    %v2709 = vpack.c.b16 %v2662, %v2661
    %v2710 = vpack.c.b16 %v2664, %v2663
    %v2711 = vpack.c.b16 %v2666, %v2665
    %v2712 = vpack.c.b16 %v2668, %v2667
    %v2713 = vpack.c.b16 %v2670, %v2669
    %v2714 = vpack.c.b16 %v2672, %v2671
    %v2715 = vpack.c.b16 %v2674, %v2673
    %v2716 = vpack.c.b16 %v2676, %v2675
    %v2717 = vpack.c.b16 %v2678, %v2677
    %v2718 = vpack.c.b16 %v2680, %v2679
    %v2719 = vpack.c.b16 %v2682, %v2681
    %v2720 = vpack.c.b16 %v2684, %v2683
    %v2721 = vpack.c.b16 %v2686, %v2685
    %v2722 = vpack.c.b16 %v2688, %v2687
    %v2723 = vpack.c.b16 %v2690, %v2689
    %v2724 = vpack.c.b16 %v2692, %v2691
    %2757 = vmatprep.subr.bf16.mxu0 0
    %2758 = vmatpush1.bf16.msra.mxu0 %v2693
    %2759 = vmatprep.subr.bf16.mxu0 0
    %2760 = vmatpush1.bf16.msra.mxu0 %v2694
    %2761 = vmatprep.subr.bf16.mxu0 0
    %2762 = vmatpush1.bf16.msra.mxu0 %v2695
    %2763 = vmatprep.subr.bf16.mxu0 0
    %2764 = vmatpush1.bf16.msra.mxu0 %v2696
    %2765 = vmatprep.subr.bf16.mxu0 0
    %2766 = vmatpush1.bf16.msra.mxu0 %v2697
    %2767 = vmatprep.subr.bf16.mxu0 0
    %2768 = vmatpush1.bf16.msra.mxu0 %v2698
    %2769 = vmatprep.subr.bf16.mxu0 0
    %2770 = vmatpush1.bf16.msra.mxu0 %v2699
    %2771 = vmatprep.subr.bf16.mxu0 0
    %2772 = vmatpush1.bf16.msra.mxu0 %v2700
    %2773 = vmatprep.subr.bf16.mxu0 0
    %2774 = vmatpush1.bf16.msra.mxu0 %v2701
    %2775 = vmatprep.subr.bf16.mxu0 0
    %2776 = vmatpush1.bf16.msra.mxu0 %v2702
    %2777 = vmatprep.subr.bf16.mxu0 0
    %2778 = vmatpush1.bf16.msra.mxu0 %v2703
    %2779 = vmatprep.subr.bf16.mxu0 0
    %2780 = vmatpush1.bf16.msra.mxu0 %v2704
    %2781 = vmatprep.subr.bf16.mxu0 0
    %2782 = vmatpush1.bf16.msra.mxu0 %v2705
    %2783 = vmatprep.subr.bf16.mxu0 0
    %2784 = vmatpush1.bf16.msra.mxu0 %v2706
    %2785 = vmatprep.subr.bf16.mxu0 0
    %2786 = vmatpush1.bf16.msra.mxu0 %v2707
    %2787 = vmatprep.subr.bf16.mxu0 0
    %2788 = vmatpush1.bf16.msra.mxu0 %v2708
    %2789 = vmatprep.mubr.bf16.mxu0 %v2555
    %2790 = vmatmul.mubr.bf16.gmra.mrb[0].mxu0 %v2554
    %v2791 = vpop.f32.mrb[0].mxu0
    %v2792 = vadd.f32 %v2563, %v2791
    %v2793 = vpop.f32.mrb[0].mxu0
    %v2794 = vpop.f32.mrb[0].mxu0
    %v2795 = vpop.f32.mrb[0].mxu0
    %2796 = vdwg.mxu0
    %2797 = vmatprep.subr.bf16.mxu0 0
    %2798 = vmatpush1.bf16.msra.mxu0 %v2709
    %2799 = vmatprep.subr.bf16.mxu0 0
    %2800 = vmatpush1.bf16.msra.mxu0 %v2710
    %2801 = vmatprep.subr.bf16.mxu0 0
    %2802 = vmatpush1.bf16.msra.mxu0 %v2711
    %2803 = vmatprep.subr.bf16.mxu0 0
    %2804 = vmatpush1.bf16.msra.mxu0 %v2712
    %2805 = vmatprep.subr.bf16.mxu0 0
    %2806 = vmatpush1.bf16.msra.mxu0 %v2713
    %2807 = vmatprep.subr.bf16.mxu0 0
    %2808 = vmatpush1.bf16.msra.mxu0 %v2714
    %2809 = vmatprep.subr.bf16.mxu0 0
    %2810 = vmatpush1.bf16.msra.mxu0 %v2715
    %2811 = vmatprep.subr.bf16.mxu0 0
    %2812 = vmatpush1.bf16.msra.mxu0 %v2716
    %2813 = vmatprep.subr.bf16.mxu0 0
    %2814 = vmatpush1.bf16.msra.mxu0 %v2717
    %2815 = vmatprep.subr.bf16.mxu0 0
    %2816 = vmatpush1.bf16.msra.mxu0 %v2718
    %2817 = vmatprep.subr.bf16.mxu0 0
    %2818 = vmatpush1.bf16.msra.mxu0 %v2719
    %2819 = vmatprep.subr.bf16.mxu0 0
    %2820 = vmatpush1.bf16.msra.mxu0 %v2720
    %2821 = vmatprep.subr.bf16.mxu0 0
    %2822 = vmatpush1.bf16.msra.mxu0 %v2721
    %2823 = vmatprep.subr.bf16.mxu0 0
    %2824 = vmatpush1.bf16.msra.mxu0 %v2722
    %2825 = vmatprep.subr.bf16.mxu0 0
    %2826 = vmatpush1.bf16.msra.mxu0 %v2723
    %2827 = vmatprep.subr.bf16.mxu0 0
    %2828 = vmatpush1.bf16.msra.mxu0 %v2724
    %2829 = vmatprep.mubr.bf16.mxu0 %v2557
    %2830 = vmatmul.mubr.bf16.gmra.mrb[0].mxu0 %v2556
    %v2831 = vpop.f32.mrb[0].mxu0
    %v2832 = vadd.f32 %v2792, %v2831
    %v2833 = vpop.f32.mrb[0].mxu0
    %v2834 = vpop.f32.mrb[0].mxu0
    %v2835 = vpop.f32.mrb[0].mxu0
    %2836 = vdwg.mxu0
    %v2837 = vmax.f32 %v2832, 0.0
    %v2838 = vld [vmem:[%s22] sm:$0xf]
    %v2839 = vld [vmem:[%s22 + $0x4] sm:$0xf]
    %v2840 = vld [vmem:[%s22 + $0x8] sm:$0xf]
    %v2841 = vld [vmem:[%s22 + $0xc] sm:$0xf]
    %v2842 = vld [vmem:[%s22 + $0x10] sm:$0xf]
    %v2843 = vld [vmem:[%s22 + $0x14] sm:$0xf]
    %v2844 = vld [vmem:[%s22 + $0x18] sm:$0xf]
    %v2845 = vld [vmem:[%s22 + $0x1c] sm:$0xf]
    %v2846 = vld [vmem:[%s22 + $0x20] sm:$0xf]
    %v2847 = vld [vmem:[%s22 + $0x24] sm:$0xf]
    %v2848 = vld [vmem:[%s22 + $0x28] sm:$0xf]
    %v2849 = vld [vmem:[%s22 + $0x2c] sm:$0xf]
    %v2850 = vld [vmem:[%s22 + $0x30] sm:$0xf]
    %v2851 = vld [vmem:[%s22 + $0x34] sm:$0xf]
    %v2852 = vld [vmem:[%s22 + $0x38] sm:$0xf]
    %v2853 = vld [vmem:[%s22 + $0x3c] sm:$0xf]
    %v2854 = vpack.c.bf16 %v2837, %v2837
    %v2855 = vld [vmem:[%s23] sm:$0x1]
    %v2857 = vlaneseq
    %v2858 = vshrl.u32 %v2857, 7
    %v2859 = vsub.s32 0, %v2858
    %v2860 = vrot.slane %v2855, %v2859
    %v2878 = vunpack.c.l.b16 %v2838
    %v2879 = vunpack.c.l.b16 %v2839
    %v2880 = vunpack.c.l.b16 %v2840
    %v2881 = vunpack.c.l.b16 %v2841
    %v2882 = vunpack.c.l.b16 %v2842
    %v2883 = vunpack.c.l.b16 %v2843
    %v2884 = vunpack.c.l.b16 %v2844
    %v2885 = vunpack.c.l.b16 %v2845
    %v2886 = vunpack.c.l.b16 %v2846
    %v2887 = vunpack.c.l.b16 %v2847
    %v2888 = vunpack.c.l.b16 %v2848
    %v2889 = vunpack.c.l.b16 %v2849
    %v2890 = vunpack.c.l.b16 %v2850
    %v2891 = vunpack.c.l.b16 %v2851
    %v2892 = vunpack.c.l.b16 %v2852
    %v2893 = vunpack.c.l.b16 %v2853
    %v2894 = vpack.c.b16 %v2879, %v2878
    %v2895 = vpack.c.b16 %v2881, %v2880
    %v2896 = vpack.c.b16 %v2883, %v2882
    %v2897 = vpack.c.b16 %v2885, %v2884
    %v2898 = vpack.c.b16 %v2887, %v2886
    %v2899 = vpack.c.b16 %v2889, %v2888
    %v2900 = vpack.c.b16 %v2891, %v2890
    %v2901 = vpack.c.b16 %v2893, %v2892
    %2910 = vmatprep.subr.bf16.mxu0 0
    %2911 = vmatpush1.bf16.msra.mxu0 %v2894
    %2912 = vmatprep.subr.bf16.mxu0 0
    %2913 = vmatpush1.bf16.msra.mxu0 %v2895
    %2914 = vmatprep.subr.bf16.mxu0 0
    %2915 = vmatpush1.bf16.msra.mxu0 %v2896
    %2916 = vmatprep.subr.bf16.mxu0 0
    %2917 = vmatpush1.bf16.msra.mxu0 %v2897
    %2918 = vmatprep.subr.bf16.mxu0 0
    %2919 = vmatpush1.bf16.msra.mxu0 %v2898
    %2920 = vmatprep.subr.bf16.mxu0 0
    %2921 = vmatpush1.bf16.msra.mxu0 %v2899
    %2922 = vmatprep.subr.bf16.mxu0 0
    %2923 = vmatpush1.bf16.msra.mxu0 %v2900
    %2924 = vmatprep.subr.bf16.mxu0 0
    %2925 = vmatpush1.bf16.msra.mxu0 %v2901
    %2926 = vmatprep.subr.bf16.mxu0 0
    %2927 = vmatpush1.bf16.msra.mxu0 0
    %2928 = vmatprep.subr.bf16.mxu0 0
    %2929 = vmatpush1.bf16.msra.mxu0 0
    %2930 = vmatprep.subr.bf16.mxu0 0
    %2931 = vmatpush1.bf16.msra.mxu0 0
    %2932 = vmatprep.subr.bf16.mxu0 0
    %2933 = vmatpush1.bf16.msra.mxu0 0
    %2934 = vmatprep.subr.bf16.mxu0 0
    %2935 = vmatpush1.bf16.msra.mxu0 0
    %2936 = vmatprep.subr.bf16.mxu0 0
    %2937 = vmatpush1.bf16.msra.mxu0 0
    %2938 = vmatprep.subr.bf16.mxu0 0
    %2939 = vmatpush1.bf16.msra.mxu0 0
    %2940 = vmatprep.subr.bf16.mxu0 0
    %2941 = vmatpush1.bf16.msra.mxu0 0
    %2942 = vmatprep.mubr.bf16.mxu0 0
    %2943 = vmatmul.mubr.bf16.gmra.mrb[0].mxu0 %v2854
    %v2944 = vpop.f32.mrb[0].mxu0
    %v2945 = vadd.f32 %v2860, %v2944
    %v2946 = vpop.f32.mrb[0].mxu0
    %v2947 = vpop.f32.mrb[0].mxu0
    %v2948 = vpop.f32.mrb[0].mxu0
    %2949 = vdwg.mxu0
    %vm2950 = vcmask 25600
    %2951 = vst.msk [vmem:[#allocation7] sm:$0x3] %vm2950, %v2945
    // Predicated region
    $region106: #{mobhynet_forward.1} parent=1 // pred_check
      _
    $region107: #{mobhynet_forward.1} parent=1 // pred_check_branch
      %2953 = sbr.rel (0) target = $region109
    $region108: #{mobhynet_forward.1} parent=1 // pred_region
      %s2955 = ssub.s32 32, 32
      %2956 = vsyncadd [#allocation4], %s2955
      %s2958 = sshll.u32 [#allocation7], 4
      %s2959 = int_to_ptr.vmem [resolvable:$true] %s2958
      %2961 = dma.vmem_to_hbm [thread:$0]  %s2959, 32, %s24, [#allocation4]
    $region109: #{mobhynet_forward.1} parent=1 // pred_fallthru
      _
    // Predicated region
    $region110: #{mobhynet_forward.1} parent=1 // pred_check
      _
    $region111: #{mobhynet_forward.1} parent=1 // pred_check_branch
      %2963 = sbr.rel (0) target = $region113
    $region112: #{mobhynet_forward.1} parent=1 // pred_region
      %2964 = dma.done [#allocation4], 32
    $region113: #{mobhynet_forward.1} parent=1 // pred_fallthru
      _
    %2965 = vsyncpa [#allocation3], 1
    %2966 = vsyncpa [#allocation6], 1
    %2967 = vsyncpa [#allocation4], 1

</llo_original>
